<compile_context>
chip_gen: v5e
topology: v5e:2x2
jax: 0.10.0
libtpu: 0.0.40
codegen_flags: <defaults>
</compile_context>

<pallas_src>
import functools

import jax
import jax.numpy as jnp
from jax.experimental import pallas as pl
from jax.experimental.pallas import tpu as pltpu


def _geovec_mlp_relu_kernel(w1_ref, b1_ref, w2_ref, b2_ref, x_ref, o_ref, *,
                            num_layers, chunk, num_chunks):
    # x_ref / o_ref : (3*V, tn)        activations, tokens on lanes
    # w1_ref        : (L, 3*Vn, 3*V)   block-diag weights (bf16 fast path / f32)
    # b1_ref        : (L, 3*Vn, chunk) biases, pre-broadcast along lanes (f32)
    # w2_ref        : (L, 3*V, 3*Vn)
    # b2_ref        : (L, 3*V, chunk)
    mxu_dtype = w1_ref.dtype

    # Lane-chunk loop keeps the per-iteration live set small (v/h/out planes of
    # width `chunk`), decoupling the big DMA block (tn) from the compute
    # working set.  num_chunks = tn // chunk is small, so a fully static unroll
    # with static (aligned) slices is used; switch to lax.fori_loop for very
    # large tn/chunk ratios.
    for ci in range(num_chunks):
        ds = pl.ds(ci * chunk, chunk)            # static, 128-aligned start
        v = x_ref[:, ds].astype(jnp.float32)     # (3V, chunk) f32 residual

        for l in range(num_layers):              # static unroll (small L)
            # Linear1 (coords fused via block-diag weight): MXU, f32 accum.
            h = jnp.dot(w1_ref[l], v.astype(mxu_dtype),
                        preferred_element_type=jnp.float32)     # (3Vn, chunk)
            # Bias + element-wise ReLU on the VPU, all f32.
            h = jnp.maximum(h + b1_ref[l], 0.0)
            # Linear2 + bias + residual.
            out = jnp.dot(w2_ref[l], h.astype(mxu_dtype),
                          preferred_element_type=jnp.float32)   # (3V, chunk)
            v = v + out + b2_ref[l]

        o_ref[:, ds] = v.astype(o_ref.dtype)


def _stack_params_blockdiag(params, chunk, w_dtype):
    """Stack per-layer params: block-diag weights + lane-pre-broadcast biases."""
    def bdiag(w):
        return jax.scipy.linalg.block_diag(w, w, w)

    def bias_lanes(b):
        # (rows, 3) -> (3*rows, chunk); row c*rows + r carries b[r, c], matching
        # the block-diagonal row ordering (coordinate-major).
        rows = b.shape[0]
        col = jnp.asarray(b, jnp.float32).T.reshape(3 * rows, 1)
        return jnp.broadcast_to(col, (3 * rows, chunk))

    w1 = jnp.stack([bdiag(p[0]) for p in params]).astype(w_dtype)       # (L,3Vn,3V)
    b1 = jnp.stack([bias_lanes(p[1]) for p in params])                  # (L,3Vn,chunk)
    w2 = jnp.stack([bdiag(p[2]) for p in params]).astype(w_dtype)       # (L,3V,3Vn)
    b2 = jnp.stack([bias_lanes(p[3]) for p in params])                  # (L,3V,chunk)
    return w1, b1, w2, b2


def geovec_mlp_relu_cvn(x, params, *, tn=1024, chunk=256, use_bf16_mxu=True):
    """Core forward pass on (3*V, N) activations (tokens on lanes).

    x:      (3*V, N) activations (f32 or bf16), coordinate-major rows.
    params: list of per-layer tuples (W1, b1, W2, b2), shapes
            W1: (V*n, V), b1: (V*n, 3), W2: (V, V*n), b2: (V, 3).
    Returns (3*V, Npad) in the same layout/dtype; lanes >= N are padding.
    """
    rows, n_tokens = x.shape
    num_layers = len(params)
    Vn, V = params[0][0].shape
    assert rows == 3 * V
    assert Vn != V, "V*n == V would trigger GeoVecLinear's identity-residual branch"
    assert chunk % 128 == 0, "chunk must be a multiple of 128 (lane-dense tiles)"

    # Token tile: as large as requested (amortizes ~0.35us/step), but capped so
    # the grid keeps >= 2 steps whenever possible (both v7x TensorCores busy).
    n_chunks_total = pl.cdiv(n_tokens, chunk)
    chunks_per_tile = max(1, min(max(1, tn // chunk), pl.cdiv(n_chunks_total, 2)))
    tn_eff = chunks_per_tile * chunk
    n_pad = pl.cdiv(n_tokens, tn_eff) * tn_eff
    if n_pad != n_tokens:
        x = jnp.pad(x, ((0, 0), (0, n_pad - n_tokens)))
    grid = (n_pad // tn_eff,)

    w_dtype = jnp.bfloat16 if use_bf16_mxu else jnp.float32
    w1, b1, w2, b2 = _stack_params_blockdiag(params, chunk, w_dtype)

    kernel = functools.partial(_geovec_mlp_relu_kernel, num_layers=num_layers,
                               chunk=chunk, num_chunks=chunks_per_tile)

    return pl.pallas_call(
        kernel,
        out_shape=jax.ShapeDtypeStruct((3 * V, n_pad), x.dtype),
        grid=grid,
        in_specs=[
            pl.BlockSpec((num_layers, 3 * Vn, 3 * V), lambda i: (0, 0, 0)),   # W1 (resident)
            pl.BlockSpec((num_layers, 3 * Vn, chunk), lambda i: (0, 0, 0)),   # b1 (resident)
            pl.BlockSpec((num_layers, 3 * V, 3 * Vn), lambda i: (0, 0, 0)),   # W2 (resident)
            pl.BlockSpec((num_layers, 3 * V, chunk), lambda i: (0, 0, 0)),    # b2 (resident)
            pl.BlockSpec((3 * V, tn_eff), lambda i: (0, i)),                  # activations
        ],
        out_specs=pl.BlockSpec((3 * V, tn_eff), lambda i: (0, i)),
        compiler_params=pltpu.CompilerParams(
            dimension_semantics=("parallel",)),
    )(w1, b1, w2, b2, x)


def geovec_mlp_multilayers_relu(vec, params, *, tn=1024, chunk=256,
                                use_bf16_mxu=True, use_bf16_act=False):
    """Compatibility wrapper matching the PyTorch (N, V, 3) interface (eval mode)."""
    N, V, C = vec.shape
    assert C == 3
    # TODO(synk): callers chaining several geometric blocks should keep
    # activations persistently in the (3*V, N) tokens-on-lanes layout (call
    # geovec_mlp_relu_cvn directly) to avoid these two HBM transpose passes.
    act_dtype = jnp.bfloat16 if use_bf16_act else vec.dtype
    # Transpose first, then pad along the token (lane) axis inside the core so
    # XLA can fuse pad+transpose into a single pass over the activations.
    x = vec.transpose(2, 1, 0).reshape(3 * V, N).astype(act_dtype)
    out = geovec_mlp_relu_cvn(x, params, tn=tn, chunk=chunk,
                              use_bf16_mxu=use_bf16_mxu)
    out = out[:, :N].reshape(3, V, N).transpose(2, 1, 0).astype(vec.dtype)
    return out


def ref_forward(vec, params):
    """Pure-JAX reference matching the PyTorch forward (eval mode)."""
    v = vec
    for (W1, b1, W2, b2) in params:
        h = jnp.einsum("nvc,wv->nwc", v, W1) + b1[None]
        h = jnp.maximum(h, 0.0)
        out = jnp.einsum("nwc,vw->nvc", h, W2) + b2[None]
        v = v + out
    return v


if __name__ == "__main__":
    # Small shapes consistent with the module: N tokens, V=16 vector channels,
    # n=2 expansion, 2 layers.  N is not a tile multiple to exercise padding.
    N, V, n_mult, num_layers = 640, 16, 2, 2
    Vn = V * n_mult

    key = jax.random.PRNGKey(0)
    key, kx = jax.random.split(key)
    vec = jax.random.normal(kx, (N, V, 3), dtype=jnp.float32)

    params = []
    for _ in range(num_layers):
        key, k1, k2, k3, k4 = jax.random.split(key, 5)
        W1 = jax.random.normal(k1, (Vn, V), dtype=jnp.float32) * (1.0 / V ** 0.5)
        b1 = jax.random.normal(k2, (Vn, 3), dtype=jnp.float32) * 0.1
        W2 = jax.random.normal(k3, (V, Vn), dtype=jnp.float32) * (1.0 / Vn ** 0.5)
        b2 = jax.random.normal(k4, (V, 3), dtype=jnp.float32) * 0.1
        params.append((W1, b1, W2, b2))

    ref = ref_forward(vec, params)

    # f32 MXU operand path: verification path (the MXU may still truncate f32
    # operands internally depending on default matmul precision, hence the
    # modest tolerance).
    out_f32 = geovec_mlp_multilayers_relu(vec, params, use_bf16_mxu=False)
    out_f32 = jax.block_until_ready(out_f32)
    assert out_f32.shape == (N, V, 3)
    assert bool(jnp.isfinite(out_f32).all())
    assert jnp.allclose(out_f32, ref, atol=5e-2, rtol=5e-2), \
        "f32 kernel mismatch vs reference"

    # bf16 MXU operands (fast path on all generations), f32 accum + f32 VPU.
    out_bf16 = geovec_mlp_multilayers_relu(vec, params, use_bf16_mxu=True)
    out_bf16 = jax.block_until_ready(out_bf16)
    assert jnp.allclose(out_bf16, ref, atol=2e-1, rtol=2e-1), \
        "bf16-MXU kernel mismatch vs reference"

    # bf16 activation I/O (HBM-bandwidth lever on v5e/v6e); math stays f32.
    out_bf16_io = geovec_mlp_multilayers_relu(vec, params, use_bf16_mxu=True,
                                              use_bf16_act=True)
    out_bf16_io = jax.block_until_ready(out_bf16_io)
    assert jnp.allclose(out_bf16_io, ref, atol=2.5e-1, rtol=2.5e-1), \
        "bf16-I/O kernel mismatch vs reference"

    print("KERNEL_OK")
</pallas_src>

<mosaic_0001>
module attributes {stable_mosaic.version = 11 : i64} {
  func.func @_geovec_mlp_relu_kernel(%arg0: i32, %arg1: memref<2x96x48xf32, #tpu.memory_space<vmem>>, %arg2: memref<2x96x256xf32, #tpu.memory_space<vmem>>, %arg3: memref<2x48x96xf32, #tpu.memory_space<vmem>>, %arg4: memref<2x48x256xf32, #tpu.memory_space<vmem>>, %arg5: memref<48x512xf32, #tpu.memory_space<vmem>>, %arg6: memref<48x512xf32, #tpu.memory_space<vmem>>) attributes {dimension_semantics = [#tpu.dimension_semantics<parallel>], iteration_bounds = array<i64: 2>, scalar_prefetch = 0 : i64, scratch_operands = 0 : i64, tpu.core_type = #tpu.core_type<tc>, window_params = [{pipeline_mode = #tpu.pipeline_mode<synchronous>, transform_indices = @transform_0, window_bounds = array<i64: 2, 96, 48>}, {pipeline_mode = #tpu.pipeline_mode<synchronous>, transform_indices = @transform_1, window_bounds = array<i64: 2, 96, 256>}, {pipeline_mode = #tpu.pipeline_mode<synchronous>, transform_indices = @transform_2, window_bounds = array<i64: 2, 48, 96>}, {pipeline_mode = #tpu.pipeline_mode<synchronous>, transform_indices = @transform_3, window_bounds = array<i64: 2, 48, 256>}, {transform_indices = @transform_4, window_bounds = array<i64: 48, 512>}, {transform_indices = @transform_5, window_bounds = array<i64: 48, 512>}]} {
    %c0 = arith.constant 0 : index
    %c0_0 = arith.constant 0 : index
    %0 = vector.load %arg5[%c0, %c0_0] : memref<48x512xf32, #tpu.memory_space<vmem>>, vector<48x256xf32>
    %c0_1 = arith.constant 0 : index
    %c0_2 = arith.constant 0 : index
    %c0_3 = arith.constant 0 : index
    %1 = vector.load %arg1[%c0_1, %c0_2, %c0_3] : memref<2x96x48xf32, #tpu.memory_space<vmem>>, vector<1x96x48xf32>
    %2 = vector.shape_cast %1 : vector<1x96x48xf32> to vector<96x48xf32>
    %cst = arith.constant dense<0.000000e+00> : vector<96x256xf32>
    %3 = tpu.matmul %2, %0, %cst {dimension_numbers = #tpu.dot_dimension_numbers<[1], [0], [0], [1], [0, 0, 1, 1], [], []>} : vector<96x48xf32>, vector<48x256xf32>, vector<96x256xf32> -> vector<96x256xf32>
    %c0_4 = arith.constant 0 : index
    %c0_5 = arith.constant 0 : index
    %c0_6 = arith.constant 0 : index
    %4 = vector.load %arg2[%c0_4, %c0_5, %c0_6] : memref<2x96x256xf32, #tpu.memory_space<vmem>>, vector<1x96x256xf32>
    %5 = vector.shape_cast %4 : vector<1x96x256xf32> to vector<96x256xf32>
    %6 = arith.addf %3, %5 : vector<96x256xf32>
    %cst_7 = arith.constant 0.000000e+00 : f32
    %7 = vector.broadcast %cst_7 : f32 to vector<96x256xf32>
    %8 = arith.maximumf %6, %7 : vector<96x256xf32>
    %c0_8 = arith.constant 0 : index
    %c0_9 = arith.constant 0 : index
    %c0_10 = arith.constant 0 : index
    %9 = vector.load %arg3[%c0_8, %c0_9, %c0_10] : memref<2x48x96xf32, #tpu.memory_space<vmem>>, vector<1x48x96xf32>
    %10 = vector.shape_cast %9 : vector<1x48x96xf32> to vector<48x96xf32>
    %cst_11 = arith.constant dense<0.000000e+00> : vector<48x256xf32>
    %11 = tpu.matmul %10, %8, %cst_11 {dimension_numbers = #tpu.dot_dimension_numbers<[1], [0], [0], [1], [0, 0, 1, 1], [], []>} : vector<48x96xf32>, vector<96x256xf32>, vector<48x256xf32> -> vector<48x256xf32>
    %12 = arith.addf %0, %11 : vector<48x256xf32>
    %c0_12 = arith.constant 0 : index
    %c0_13 = arith.constant 0 : index
    %c0_14 = arith.constant 0 : index
    %13 = vector.load %arg4[%c0_12, %c0_13, %c0_14] : memref<2x48x256xf32, #tpu.memory_space<vmem>>, vector<1x48x256xf32>
    %14 = vector.shape_cast %13 : vector<1x48x256xf32> to vector<48x256xf32>
    %15 = arith.addf %12, %14 : vector<48x256xf32>
    %c1 = arith.constant 1 : index
    %c0_15 = arith.constant 0 : index
    %c0_16 = arith.constant 0 : index
    %16 = vector.load %arg1[%c1, %c0_15, %c0_16] : memref<2x96x48xf32, #tpu.memory_space<vmem>>, vector<1x96x48xf32>
    %17 = vector.shape_cast %16 : vector<1x96x48xf32> to vector<96x48xf32>
    %cst_17 = arith.constant dense<0.000000e+00> : vector<96x256xf32>
    %18 = tpu.matmul %17, %15, %cst_17 {dimension_numbers = #tpu.dot_dimension_numbers<[1], [0], [0], [1], [0, 0, 1, 1], [], []>} : vector<96x48xf32>, vector<48x256xf32>, vector<96x256xf32> -> vector<96x256xf32>
    %c1_18 = arith.constant 1 : index
    %c0_19 = arith.constant 0 : index
    %c0_20 = arith.constant 0 : index
    %19 = vector.load %arg2[%c1_18, %c0_19, %c0_20] : memref<2x96x256xf32, #tpu.memory_space<vmem>>, vector<1x96x256xf32>
    %20 = vector.shape_cast %19 : vector<1x96x256xf32> to vector<96x256xf32>
    %21 = arith.addf %18, %20 : vector<96x256xf32>
    %cst_21 = arith.constant 0.000000e+00 : f32
    %22 = vector.broadcast %cst_21 : f32 to vector<96x256xf32>
    %23 = arith.maximumf %21, %22 : vector<96x256xf32>
    %c1_22 = arith.constant 1 : index
    %c0_23 = arith.constant 0 : index
    %c0_24 = arith.constant 0 : index
    %24 = vector.load %arg3[%c1_22, %c0_23, %c0_24] : memref<2x48x96xf32, #tpu.memory_space<vmem>>, vector<1x48x96xf32>
    %25 = vector.shape_cast %24 : vector<1x48x96xf32> to vector<48x96xf32>
    %cst_25 = arith.constant dense<0.000000e+00> : vector<48x256xf32>
    %26 = tpu.matmul %25, %23, %cst_25 {dimension_numbers = #tpu.dot_dimension_numbers<[1], [0], [0], [1], [0, 0, 1, 1], [], []>} : vector<48x96xf32>, vector<96x256xf32>, vector<48x256xf32> -> vector<48x256xf32>
    %27 = arith.addf %15, %26 : vector<48x256xf32>
    %c1_26 = arith.constant 1 : index
    %c0_27 = arith.constant 0 : index
    %c0_28 = arith.constant 0 : index
    %28 = vector.load %arg4[%c1_26, %c0_27, %c0_28] : memref<2x48x256xf32, #tpu.memory_space<vmem>>, vector<1x48x256xf32>
    %29 = vector.shape_cast %28 : vector<1x48x256xf32> to vector<48x256xf32>
    %30 = arith.addf %27, %29 : vector<48x256xf32>
    %c0_29 = arith.constant 0 : index
    %c0_30 = arith.constant 0 : index
    %31 = vector.load %arg6[%c0_29, %c0_30] : memref<48x512xf32, #tpu.memory_space<vmem>>, vector<48x256xf32>
    tpu.vector_store %arg6[%c0_29, %c0_30], %30 {strides = array<i32>} : memref<48x512xf32, #tpu.memory_space<vmem>>, vector<48x256xf32>,
    %c0_31 = arith.constant 0 : index
    %c256 = arith.constant 256 : index
    %32 = vector.load %arg5[%c0_31, %c256] : memref<48x512xf32, #tpu.memory_space<vmem>>, vector<48x256xf32>
    %c0_32 = arith.constant 0 : index
    %c0_33 = arith.constant 0 : index
    %c0_34 = arith.constant 0 : index
    %33 = vector.load %arg1[%c0_32, %c0_33, %c0_34] : memref<2x96x48xf32, #tpu.memory_space<vmem>>, vector<1x96x48xf32>
    %34 = vector.shape_cast %33 : vector<1x96x48xf32> to vector<96x48xf32>
    %cst_35 = arith.constant dense<0.000000e+00> : vector<96x256xf32>
    %35 = tpu.matmul %34, %32, %cst_35 {dimension_numbers = #tpu.dot_dimension_numbers<[1], [0], [0], [1], [0, 0, 1, 1], [], []>} : vector<96x48xf32>, vector<48x256xf32>, vector<96x256xf32> -> vector<96x256xf32>
    %c0_36 = arith.constant 0 : index
    %c0_37 = arith.constant 0 : index
    %c0_38 = arith.constant 0 : index
    %36 = vector.load %arg2[%c0_36, %c0_37, %c0_38] : memref<2x96x256xf32, #tpu.memory_space<vmem>>, vector<1x96x256xf32>
    %37 = vector.shape_cast %36 : vector<1x96x256xf32> to vector<96x256xf32>
    %38 = arith.addf %35, %37 : vector<96x256xf32>
    %cst_39 = arith.constant 0.000000e+00 : f32
    %39 = vector.broadcast %cst_39 : f32 to vector<96x256xf32>
    %40 = arith.maximumf %38, %39 : vector<96x256xf32>
    %c0_40 = arith.constant 0 : index
    %c0_41 = arith.constant 0 : index
    %c0_42 = arith.constant 0 : index
    %41 = vector.load %arg3[%c0_40, %c0_41, %c0_42] : memref<2x48x96xf32, #tpu.memory_space<vmem>>, vector<1x48x96xf32>
    %42 = vector.shape_cast %41 : vector<1x48x96xf32> to vector<48x96xf32>
    %cst_43 = arith.constant dense<0.000000e+00> : vector<48x256xf32>
    %43 = tpu.matmul %42, %40, %cst_43 {dimension_numbers = #tpu.dot_dimension_numbers<[1], [0], [0], [1], [0, 0, 1, 1], [], []>} : vector<48x96xf32>, vector<96x256xf32>, vector<48x256xf32> -> vector<48x256xf32>
    %44 = arith.addf %32, %43 : vector<48x256xf32>
    %c0_44 = arith.constant 0 : index
    %c0_45 = arith.constant 0 : index
    %c0_46 = arith.constant 0 : index
    %45 = vector.load %arg4[%c0_44, %c0_45, %c0_46] : memref<2x48x256xf32, #tpu.memory_space<vmem>>, vector<1x48x256xf32>
    %46 = vector.shape_cast %45 : vector<1x48x256xf32> to vector<48x256xf32>
    %47 = arith.addf %44, %46 : vector<48x256xf32>
    %c1_47 = arith.constant 1 : index
    %c0_48 = arith.constant 0 : index
    %c0_49 = arith.constant 0 : index
    %48 = vector.load %arg1[%c1_47, %c0_48, %c0_49] : memref<2x96x48xf32, #tpu.memory_space<vmem>>, vector<1x96x48xf32>
    %49 = vector.shape_cast %48 : vector<1x96x48xf32> to vector<96x48xf32>
    %cst_50 = arith.constant dense<0.000000e+00> : vector<96x256xf32>
    %50 = tpu.matmul %49, %47, %cst_50 {dimension_numbers = #tpu.dot_dimension_numbers<[1], [0], [0], [1], [0, 0, 1, 1], [], []>} : vector<96x48xf32>, vector<48x256xf32>, vector<96x256xf32> -> vector<96x256xf32>
    %c1_51 = arith.constant 1 : index
    %c0_52 = arith.constant 0 : index
    %c0_53 = arith.constant 0 : index
    %51 = vector.load %arg2[%c1_51, %c0_52, %c0_53] : memref<2x96x256xf32, #tpu.memory_space<vmem>>, vector<1x96x256xf32>
    %52 = vector.shape_cast %51 : vector<1x96x256xf32> to vector<96x256xf32>
    %53 = arith.addf %50, %52 : vector<96x256xf32>
    %cst_54 = arith.constant 0.000000e+00 : f32
    %54 = vector.broadcast %cst_54 : f32 to vector<96x256xf32>
    %55 = arith.maximumf %53, %54 : vector<96x256xf32>
    %c1_55 = arith.constant 1 : index
    %c0_56 = arith.constant 0 : index
    %c0_57 = arith.constant 0 : index
    %56 = vector.load %arg3[%c1_55, %c0_56, %c0_57] : memref<2x48x96xf32, #tpu.memory_space<vmem>>, vector<1x48x96xf32>
    %57 = vector.shape_cast %56 : vector<1x48x96xf32> to vector<48x96xf32>
    %cst_58 = arith.constant dense<0.000000e+00> : vector<48x256xf32>
    %58 = tpu.matmul %57, %55, %cst_58 {dimension_numbers = #tpu.dot_dimension_numbers<[1], [0], [0], [1], [0, 0, 1, 1], [], []>} : vector<48x96xf32>, vector<96x256xf32>, vector<48x256xf32> -> vector<48x256xf32>
    %59 = arith.addf %47, %58 : vector<48x256xf32>
    %c1_59 = arith.constant 1 : index
    %c0_60 = arith.constant 0 : index
    %c0_61 = arith.constant 0 : index
    %60 = vector.load %arg4[%c1_59, %c0_60, %c0_61] : memref<2x48x256xf32, #tpu.memory_space<vmem>>, vector<1x48x256xf32>
    %61 = vector.shape_cast %60 : vector<1x48x256xf32> to vector<48x256xf32>
    %62 = arith.addf %59, %61 : vector<48x256xf32>
    %c0_62 = arith.constant 0 : index
    %c256_63 = arith.constant 256 : index
    %63 = vector.load %arg6[%c0_62, %c256_63] : memref<48x512xf32, #tpu.memory_space<vmem>>, vector<48x256xf32>
    tpu.vector_store %arg6[%c0_62, %c256_63], %62 {strides = array<i32>} : memref<48x512xf32, #tpu.memory_space<vmem>>, vector<48x256xf32>,
    return
  }
  func.func @transform_0(%arg0: i32) -> (i32, i32, i32) {
    %c0_i32 = arith.constant 0 : i32
    %c0_i32_0 = arith.constant 0 : i32
    %c0_i32_1 = arith.constant 0 : i32
    %c0_i32_2 = arith.constant 0 : i32
    return %c0_i32, %c0_i32_0, %c0_i32_1 : i32, i32, i32
  }
  func.func @transform_1(%arg0: i32) -> (i32, i32, i32) {
    %c0_i32 = arith.constant 0 : i32
    %c0_i32_0 = arith.constant 0 : i32
    %c0_i32_1 = arith.constant 0 : i32
    %c0_i32_2 = arith.constant 0 : i32
    return %c0_i32, %c0_i32_0, %c0_i32_1 : i32, i32, i32
  }
  func.func @transform_2(%arg0: i32) -> (i32, i32, i32) {
    %c0_i32 = arith.constant 0 : i32
    %c0_i32_0 = arith.constant 0 : i32
    %c0_i32_1 = arith.constant 0 : i32
    %c0_i32_2 = arith.constant 0 : i32
    return %c0_i32, %c0_i32_0, %c0_i32_1 : i32, i32, i32
  }
  func.func @transform_3(%arg0: i32) -> (i32, i32, i32) {
    %c0_i32 = arith.constant 0 : i32
    %c0_i32_0 = arith.constant 0 : i32
    %c0_i32_1 = arith.constant 0 : i32
    %c0_i32_2 = arith.constant 0 : i32
    return %c0_i32, %c0_i32_0, %c0_i32_1 : i32, i32, i32
  }
  func.func @transform_4(%arg0: i32) -> (i32, i32) {
    %c0_i32 = arith.constant 0 : i32
    %c0_i32_0 = arith.constant 0 : i32
    return %c0_i32, %arg0 : i32, i32
  }
  func.func @transform_5(%arg0: i32) -> (i32, i32) {
    %c0_i32 = arith.constant 0 : i32
    %c0_i32_0 = arith.constant 0 : i32
    return %c0_i32, %arg0 : i32, i32
  }
}

</mosaic_0001>

<llo_original>
// kernel: tpu_custom_call.1
$region0: #{tpu_custom_call.1}
  #allocation0 [shape = 'u32[]', space=smem, size = 0x4, offset = 0x4, fixed_abs, tag = 'smem constant byte address 0x4 - core index']
  #allocation1 [shape = 'u32[72,128]{1,0:T(1,128)}', space=vmem, size = 0x9000, scoped, tag = 'internal scratch']
  %s0 = inlined_call_operand.vmem [shape: f32[2,96,48], index: 0, kind: input, shape index: {}]
  %s1 = inlined_call_operand.hbm [shape: f32[2,96,256], index: 1, kind: input, shape index: {}]
  %s2 = inlined_call_operand.vmem [shape: f32[2,48,96], index: 2, kind: input, shape index: {}]
  %s3 = inlined_call_operand.vmem [shape: f32[2,48,256], index: 3, kind: input, shape index: {}]
  %s4 = inlined_call_operand.hbm [shape: f32[48,1024], index: 4, kind: input, shape index: {}]
  %s5 = inlined_call_operand.hbm [shape: f32[48,1024], index: 5, kind: output, shape index: {}]
  %s6 = sld [smem:[#allocation0]]
  $region61: #{tpu_custom_call.1} parent=0
    _
  %s8 = ssub.s32 1, %s6
  %s9 = scalar_select 0, %s8, %s6
  $region1: #{tpu_custom_call.1} parent=0
    #allocation2 [shape = 'u8[196608]{0}', space=vmem, size = 0x30000, scoped, tag = 'input window, operand 1, single buffered']
    #allocation3 [shape = 's32[2]{0}', space=sflag, size = 0x8, scoped, tag = 'scoped memory for tpu_custom_call.1']
    #allocation4 [shape = 's32[2]{0}', space=sflag, size = 0x8, scoped, tag = 'scoped memory for tpu_custom_call.1']
    #allocation5 [shape = 'u8[196608]{0}', space=vmem, size = 0x30000, scoped, tag = 'input window, operand 4']
    #allocation6 [shape = 's32[2]{0}', space=sflag, size = 0x8, scoped, tag = 'scoped memory for tpu_custom_call.1']
    #allocation7 [shape = 'u8[196608]{0}', space=vmem, size = 0x30000, scoped, tag = 'output window, operand 0']
    %10 = vsyncpa [#allocation3], 0
    %11 = vsyncpa [#allocation6], 0
    %s12 = scalar_lea.sflag [#allocation6], 1
    %13 = vsyncpa %s12, 0
    %14 = vsyncpa [#allocation4], 0
    %s15 = scalar_lea.sflag [#allocation4], 1
    %16 = vsyncpa %s15, 0
    loop: start=0, step=1, limit=4
    $region2: #{tpu_custom_call.1} parent=1 // loop_pre_header
      _
    $region3: #{tpu_custom_call.1} parent=1 // loop_header
      %s18 = sphi 0, %s22
      %p19 = scmp.ge.s32.totalorder %s18, 4
      %s26 = sphi 0, %s26
      %s28 = sphi 0, %s26
      %s29 = sphi 0, %s28
      %s43 = sphi 0, %s29
      %s47 = sphi 0, %s47
      %s49 = sphi 0, %s47
      %s50 = sphi 0, %s49
      %s64 = sphi 0, %s50
      %s68 = sphi 0, %s68
      %s70 = sphi 0, %s68
      %s71 = sphi 0, %s70
      %s85 = sphi 0, %s71
      %s89 = sphi 0, %s89
      %s91 = sphi 0, %s89
      %s92 = sphi 0, %s91
      %s106 = sphi 0, %s92
      %s112 = sphi 0, %s114
      %s115 = sphi 0, %s112
      %s116 = sphi 0, %s115
      %s132 = sphi 0, %s116
      %s138 = sphi 0, %s140
      %s141 = sphi 0, %s138
      %s142 = sphi 0, %s141
      %s158 = sphi 0, %s142
    $region4: #{tpu_custom_call.1} parent=1 // loop_header_branch
      %21 = sbr.rel (%p19) target = $region8
    $region5: #{tpu_custom_call.1} parent=1 // loop_body
      %s23 = ssub.s32 %s18, 1
      %s24 = ssub.s32 %s18, 2
      %s25 = sadd.s32 %s18, 1
      %s27 = sadd.s32 %s26, 1
      %p30 = scmp.eq.s32.totalorder %s18, 1
      %p31 = scmp.ne.s32.totalorder %s26, %s28
      %p32 = scmp.eq.s32.totalorder %s18, 0
      %p33 = por %p31, %p32
      %p34 = scmp.ne.s32.totalorder %s26, %s28
      %p35 = scmp.eq.s32.totalorder %s23, 1
      %p36 = por %p34, %p35
      %p37 = scmp.ne.s32.totalorder %s28, %s29
      %p38 = scmp.eq.s32.totalorder %s23, 0
      %p39 = por %p37, %p38
      %p40 = scmp.ne.s32.totalorder %s28, %s29
      %p41 = scmp.eq.s32.totalorder %s24, 1
      %p42 = por %p40, %p41
      %p44 = scmp.ne.s32.totalorder %s29, %s43
      %p45 = scmp.eq.s32.totalorder %s24, 0
      %p46 = por %p44, %p45
      %s48 = sadd.s32 %s47, 1
      %p51 = scmp.eq.s32.totalorder %s18, 1
      %p52 = scmp.ne.s32.totalorder %s47, %s49
      %p53 = scmp.eq.s32.totalorder %s18, 0
      %p54 = por %p52, %p53
      %p55 = scmp.ne.s32.totalorder %s47, %s49
      %p56 = scmp.eq.s32.totalorder %s23, 1
      %p57 = por %p55, %p56
      %p58 = scmp.ne.s32.totalorder %s49, %s50
      %p59 = scmp.eq.s32.totalorder %s23, 0
      %p60 = por %p58, %p59
      %p61 = scmp.ne.s32.totalorder %s49, %s50
      %p62 = scmp.eq.s32.totalorder %s24, 1
      %p63 = por %p61, %p62
      %p65 = scmp.ne.s32.totalorder %s50, %s64
      %p66 = scmp.eq.s32.totalorder %s24, 0
      %p67 = por %p65, %p66
      %s69 = sadd.s32 %s68, 1
      %p72 = scmp.eq.s32.totalorder %s18, 1
      %p73 = scmp.ne.s32.totalorder %s68, %s70
      %p74 = scmp.eq.s32.totalorder %s18, 0
      %p75 = por %p73, %p74
      %p76 = scmp.ne.s32.totalorder %s68, %s70
      %p77 = scmp.eq.s32.totalorder %s23, 1
      %p78 = por %p76, %p77
      %p79 = scmp.ne.s32.totalorder %s70, %s71
      %p80 = scmp.eq.s32.totalorder %s23, 0
      %p81 = por %p79, %p80
      %p82 = scmp.ne.s32.totalorder %s70, %s71
      %p83 = scmp.eq.s32.totalorder %s24, 1
      %p84 = por %p82, %p83
      %p86 = scmp.ne.s32.totalorder %s71, %s85
      %p87 = scmp.eq.s32.totalorder %s24, 0
      %p88 = por %p86, %p87
      %s90 = sadd.s32 %s89, 1
      %p93 = scmp.eq.s32.totalorder %s18, 1
      %p94 = scmp.ne.s32.totalorder %s89, %s91
      %p95 = scmp.eq.s32.totalorder %s18, 0
      %p96 = por %p94, %p95
      %p97 = scmp.ne.s32.totalorder %s89, %s91
      %p98 = scmp.eq.s32.totalorder %s23, 1
      %p99 = por %p97, %p98
      %p100 = scmp.ne.s32.totalorder %s91, %s92
      %p101 = scmp.eq.s32.totalorder %s23, 0
      %p102 = por %p100, %p101
      %p103 = scmp.ne.s32.totalorder %s91, %s92
      %p104 = scmp.eq.s32.totalorder %s24, 1
      %p105 = por %p103, %p104
      %p107 = scmp.ne.s32.totalorder %s92, %s106
      %p108 = scmp.eq.s32.totalorder %s24, 0
      %p109 = por %p107, %p108
      %s110 = ssub.s32 %s18, %s25
      %p111 = scmp.eq.s32.totalorder %s110, 0
      %s113 = sadd.s32 %s112, 1
      %s114 = scalar_select %p111, %s112, %s113
      %p117 = pneg %p111
      %p118 = scmp.eq.s32.totalorder %s18, 1
      %p119 = por %p117, %p118
      %p120 = scmp.ne.s32.totalorder %s112, %s115
      %p121 = scmp.eq.s32.totalorder %s18, 0
      %p122 = por %p120, %p121
      %p123 = scmp.ne.s32.totalorder %s112, %s115
      %p124 = scmp.eq.s32.totalorder %s23, 1
      %p125 = por %p123, %p124
      %p126 = scmp.ne.s32.totalorder %s115, %s116
      %p127 = scmp.eq.s32.totalorder %s23, 0
      %p128 = por %p126, %p127
      %p129 = scmp.ne.s32.totalorder %s115, %s116
      %p130 = scmp.eq.s32.totalorder %s24, 1
      %p131 = por %p129, %p130
      %p133 = scmp.ne.s32.totalorder %s116, %s132
      %p134 = scmp.eq.s32.totalorder %s24, 0
      %p135 = por %p133, %p134
      %s136 = ssub.s32 %s18, %s25
      %p137 = scmp.eq.s32.totalorder %s136, 0
      %s139 = sadd.s32 %s138, 1
      %s140 = scalar_select %p137, %s138, %s139
      %p143 = pneg %p137
      %p144 = scmp.eq.s32.totalorder %s18, 1
      %p145 = por %p143, %p144
      %p146 = scmp.ne.s32.totalorder %s138, %s141
      %p147 = scmp.eq.s32.totalorder %s18, 0
      %p148 = por %p146, %p147
      %p149 = scmp.ne.s32.totalorder %s138, %s141
      %p150 = scmp.eq.s32.totalorder %s23, 1
      %p151 = por %p149, %p150
      %p152 = scmp.ne.s32.totalorder %s141, %s142
      %p153 = scmp.eq.s32.totalorder %s23, 0
      %p154 = por %p152, %p153
      %p155 = scmp.ne.s32.totalorder %s141, %s142
      %p156 = scmp.eq.s32.totalorder %s24, 1
      %p157 = por %p155, %p156
      %p159 = scmp.ne.s32.totalorder %s142, %s158
      %p160 = scmp.eq.s32.totalorder %s24, 0
      %p161 = por %p159, %p160
      %p162 = scmp.le.s32.totalorder 1, %s18
      %p163 = scmp.lt.s32.totalorder %s18, 3
      %p164 = pnand %p162, %p163
      %p165 = pneg %p164
      // Predicated region
      $region9: #{tpu_custom_call.1} parent=5 // pred_check
        _
      $region10: #{tpu_custom_call.1} parent=5 // pred_check_branch
        %167 = sbr.rel (%p164) target = $region12
      $region11: #{tpu_custom_call.1} parent=5 // pred_region
        %s168 = ssub.s32 %s18, 1
        // Predicated region
        $region13: #{tpu_custom_call.1} parent=11 // pred_check
          %p169 = pneg %p39
        $region14: #{tpu_custom_call.1} parent=11 // pred_check_branch
          %171 = sbr.rel (%p169) target = $region16
        $region15: #{tpu_custom_call.1} parent=11 // pred_region
          _
        $region16: #{tpu_custom_call.1} parent=11 // pred_fallthru
          _
        // Predicated region
        $region17: #{tpu_custom_call.1} parent=11 // pred_check
          %p172 = pneg %p60
        $region18: #{tpu_custom_call.1} parent=11 // pred_check_branch
          %174 = sbr.rel (%p172) target = $region20
        $region19: #{tpu_custom_call.1} parent=11 // pred_region
          %176 = vsyncadd [#allocation3], 0
          %s177 = sshll.u32 %s1, 4
          %s178 = int_to_ptr.hbm [resolvable:$true] %s177
          %s179 = sshll.u32 [#allocation2], 4
          %s180 = int_to_ptr.vmem [resolvable:$true] %s179
          %185 = dma.hbm_to_vmem [thread:$0]  %s178, 6144, %s180, [#allocation3], 256, 256, 16
        $region20: #{tpu_custom_call.1} parent=11 // pred_fallthru
          _
        // Predicated region
        $region21: #{tpu_custom_call.1} parent=11 // pred_check
          %p186 = pneg %p81
        $region22: #{tpu_custom_call.1} parent=11 // pred_check_branch
          %188 = sbr.rel (%p186) target = $region24
        $region23: #{tpu_custom_call.1} parent=11 // pred_region
          _
        $region24: #{tpu_custom_call.1} parent=11 // pred_fallthru
          _
        // Predicated region
        $region25: #{tpu_custom_call.1} parent=11 // pred_check
          %p189 = pneg %p102
        $region26: #{tpu_custom_call.1} parent=11 // pred_check_branch
          %191 = sbr.rel (%p189) target = $region28
        $region27: #{tpu_custom_call.1} parent=11 // pred_region
          _
        $region28: #{tpu_custom_call.1} parent=11 // pred_fallthru
          _
      $region12: #{tpu_custom_call.1} parent=5 // pred_fallthru
        _
      %p192 = scmp.lt.s32.totalorder %s18, 2
      // Predicated region
      $region29: #{tpu_custom_call.1} parent=5 // pred_check
        %p193 = pneg %p192
      $region30: #{tpu_custom_call.1} parent=5 // pred_check_branch
        %195 = sbr.rel (%p193) target = $region32
      $region31: #{tpu_custom_call.1} parent=5 // pred_region
        // Predicated region
        $region33: #{tpu_custom_call.1} parent=31 // pred_check
          %p196 = pneg %p122
        $region34: #{tpu_custom_call.1} parent=31 // pred_check_branch
          %198 = sbr.rel (%p196) target = $region36
        $region35: #{tpu_custom_call.1} parent=31 // pred_region
          %s199 = sand.u32 %s112, 1
          %s200 = scalar_lea.sflag [#allocation6], %s199
          %s201 = sand.u32 %s112, 1
          %s202 = smul.addr %s201, 192
          %s203 = scalar_lea.vmem [#allocation5], %s202
          %s204 = smul.u32 4, %s18
          %206 = vsyncadd %s200, 0
          %s207 = smul.addr %s204, 8
          %s208 = scalar_lea.hbm %s4, %s207
          %s209 = sshll.u32 %s208, 4
          %s210 = int_to_ptr.hbm [resolvable:$true] %s209
          %s211 = sshll.u32 %s203, 4
          %s212 = int_to_ptr.vmem [resolvable:$true] %s211
          %217 = dma.hbm_to_vmem [thread:$0]  %s210, 3072, %s212, %s200, 1024, 512, 32
        $region36: #{tpu_custom_call.1} parent=31 // pred_fallthru
          _
      $region32: #{tpu_custom_call.1} parent=5 // pred_fallthru
        _
      %p218 = scmp.le.s32.totalorder 1, %s18
      %p219 = scmp.lt.s32.totalorder %s18, 3
      %p220 = pnand %p218, %p219
      %p221 = pneg %p220
      // Predicated region
      $region37: #{tpu_custom_call.1} parent=5 // pred_check
        _
      $region38: #{tpu_custom_call.1} parent=5 // pred_check_branch
        %223 = sbr.rel (%p220) target = $region40
      $region39: #{tpu_custom_call.1} parent=5 // pred_region
        %s224 = ssub.s32 %s18, 1
        // Predicated region
        $region41: #{tpu_custom_call.1} parent=39 // pred_check
          %p225 = pneg %p60
        $region42: #{tpu_custom_call.1} parent=39 // pred_check_branch
          %227 = sbr.rel (%p225) target = $region44
        $region43: #{tpu_custom_call.1} parent=39 // pred_region
          %229 = dma.done [#allocation3], 6144
        $region44: #{tpu_custom_call.1} parent=39 // pred_fallthru
          _
        %s230 = sand.u32 %s115, 1
        %s231 = scalar_lea.sflag [#allocation6], %s230
        %s232 = sand.u32 %s115, 1
        %s233 = smul.addr %s232, 192
        %s234 = scalar_lea.vmem [#allocation5], %s233
        // Predicated region
        $region45: #{tpu_custom_call.1} parent=39 // pred_check
          %p235 = pneg %p128
        $region46: #{tpu_custom_call.1} parent=39 // pred_check_branch
          %237 = sbr.rel (%p235) target = $region48
        $region47: #{tpu_custom_call.1} parent=39 // pred_region
          %239 = dma.done %s231, 3072
        $region48: #{tpu_custom_call.1} parent=39 // pred_fallthru
          _
        %p240 = pneg %p39
        %p241 = pneg %p36
        %p242 = pneg %p60
        %p243 = pneg %p57
        %p244 = pneg %p81
        %p245 = pneg %p78
        %p246 = pneg %p102
        %p247 = pneg %p99
        %s248 = sand.u32 %s115, 1
        %s249 = scalar_lea.sflag [#allocation6], %s248
        %s250 = sand.u32 %s115, 1
        %s251 = smul.addr %s250, 192
        %s252 = scalar_lea.vmem [#allocation5], %s251
        %p253 = pneg %p128
        %p254 = pneg %p125
        %p255 = pneg %p154
        %p256 = pneg %p151
        %s257 = sand.u32 %s141, 1
        %s258 = scalar_lea.sflag [#allocation4], %s257
        %s259 = sand.u32 %s141, 1
        %s260 = smul.addr %s259, 192
        %s261 = scalar_lea.vmem [#allocation7], %s260
        %s262 = smul.u32 4, %s23
        %s263 = smul.u32 4, %s23
        %v264 = vld [vmem:[%s234] sm:$0xff]
        %v265 = vld [vmem:[%s234 + $0x8] sm:$0xff]
        %v266 = vld [vmem:[%s234 + $0x20] sm:$0xff]
        %v267 = vld [vmem:[%s234 + $0x28] sm:$0xff]
        %v268 = vld [vmem:[%s234 + $0x40] sm:$0xff]
        %v269 = vld [vmem:[%s234 + $0x48] sm:$0xff]
        %v270 = vld [vmem:[%s234 + $0x60] sm:$0xff]
        %v271 = vld [vmem:[%s234 + $0x68] sm:$0xff]
        %v272 = vld [vmem:[%s234 + $0x80] sm:$0xff]
        %v273 = vld [vmem:[%s234 + $0x88] sm:$0xff]
        %v274 = vld [vmem:[%s234 + $0xa0] sm:$0xff]
        %v275 = vld [vmem:[%s234 + $0xa8] sm:$0xff]
        %v276 = vld [vmem:[%s0] sm:$0xff]
        %v277 = vld [vmem:[%s0 + $0x8] sm:$0xff]
        %v278 = vld [vmem:[%s0 + $0x10] sm:$0xff]
        %v279 = vld [vmem:[%s0 + $0x18] sm:$0xff]
        %v280 = vld [vmem:[%s0 + $0x20] sm:$0xff]
        %v281 = vld [vmem:[%s0 + $0x28] sm:$0xff]
        %v282 = vld [vmem:[%s0 + $0x30] sm:$0xff]
        %v283 = vld [vmem:[%s0 + $0x38] sm:$0xff]
        %v284 = vld [vmem:[%s0 + $0x40] sm:$0xff]
        %v285 = vld [vmem:[%s0 + $0x48] sm:$0xff]
        %v286 = vld [vmem:[%s0 + $0x50] sm:$0xff]
        %v287 = vld [vmem:[%s0 + $0x58] sm:$0xff]
        %v288 = vld [vmem:[#allocation2] sm:$0xff]
        %v289 = vld [vmem:[#allocation2 + $0x8] sm:$0xff]
        %v290 = vld [vmem:[#allocation2 + $0x10] sm:$0xff]
        %v291 = vld [vmem:[#allocation2 + $0x18] sm:$0xff]
        %v292 = vld [vmem:[#allocation2 + $0x20] sm:$0xff]
        %v293 = vld [vmem:[#allocation2 + $0x28] sm:$0xff]
        %v294 = vld [vmem:[#allocation2 + $0x30] sm:$0xff]
        %v295 = vld [vmem:[#allocation2 + $0x38] sm:$0xff]
        %v296 = vld [vmem:[#allocation2 + $0x40] sm:$0xff]
        %v297 = vld [vmem:[#allocation2 + $0x48] sm:$0xff]
        %v298 = vld [vmem:[#allocation2 + $0x50] sm:$0xff]
        %v299 = vld [vmem:[#allocation2 + $0x58] sm:$0xff]
        %v300 = vld [vmem:[#allocation2 + $0x60] sm:$0xff]
        %v301 = vld [vmem:[#allocation2 + $0x68] sm:$0xff]
        %v302 = vld [vmem:[#allocation2 + $0x70] sm:$0xff]
        %v303 = vld [vmem:[#allocation2 + $0x78] sm:$0xff]
        %v304 = vld [vmem:[#allocation2 + $0x80] sm:$0xff]
        %v305 = vld [vmem:[#allocation2 + $0x88] sm:$0xff]
        %v306 = vld [vmem:[#allocation2 + $0x90] sm:$0xff]
        %v307 = vld [vmem:[#allocation2 + $0x98] sm:$0xff]
        %v308 = vld [vmem:[#allocation2 + $0xa0] sm:$0xff]
        %v309 = vld [vmem:[#allocation2 + $0xa8] sm:$0xff]
        %v310 = vld [vmem:[#allocation2 + $0xb0] sm:$0xff]
        %v311 = vld [vmem:[#allocation2 + $0xb8] sm:$0xff]
        %vm312 = vcmask 392192
        %v314 = vsel %vm312, %v276, 0
        %v317 = vsel %vm312, %v277, 0
        %v320 = vsel %vm312, %v278, 0
        %v323 = vsel %vm312, %v279, 0
        %v326 = vsel %vm312, %v280, 0
        %v329 = vsel %vm312, %v281, 0
        %v332 = vsel %vm312, %v282, 0
        %v335 = vsel %vm312, %v283, 0
        %v338 = vsel %vm312, %v284, 0
        %v341 = vsel %vm312, %v285, 0
        %v344 = vsel %vm312, %v286, 0
        %v347 = vsel %vm312, %v287, 0
        %349 = vmatpush.msra.mxu0 0.0
        %350 = vmatpush.msra.mxu0 0.0
        %351 = vmatpush.msra.mxu0 0.0
        %352 = vmatpush.msra.mxu0 0.0
        %353 = vmatpush.msra.mxu0 0.0
        %354 = vmatpush.msra.mxu0 0.0
        %355 = vmatpush.msra.mxu0 0.0
        %356 = vmatpush.msra.mxu0 0.0
        %357 = vmatpush.msra.mxu0 0.0
        %358 = vmatpush.msra.mxu0 0.0
        %359 = vmatpush.msra.mxu0 %v274
        %360 = vmatpush.msra.mxu0 %v272
        %361 = vmatpush.msra.mxu0 %v270
        %362 = vmatpush.msra.mxu0 %v268
        %363 = vmatpush.msra.mxu0 %v266
        %364 = vmatpush.msra.mxu0 %v264
        %365 = vmatmul.f32.gmra.mxu0 %v314
        %v366 = vpop.f32.mrf.mxu0
        %v367 = vadd.f32 %v288, %v366
        %368 = vmatmul.f32.gmra.mxu0 %v317
        %v369 = vpop.f32.mrf.mxu0
        %v370 = vadd.f32 %v290, %v369
        %371 = vmatmul.f32.gmra.mxu0 %v320
        %v372 = vpop.f32.mrf.mxu0
        %v373 = vadd.f32 %v292, %v372
        %374 = vmatmul.f32.gmra.mxu0 %v323
        %v375 = vpop.f32.mrf.mxu0
        %v376 = vadd.f32 %v294, %v375
        %377 = vmatmul.f32.gmra.mxu0 %v326
        %v378 = vpop.f32.mrf.mxu0
        %v379 = vadd.f32 %v296, %v378
        %380 = vmatmul.f32.gmra.mxu0 %v329
        %v381 = vpop.f32.mrf.mxu0
        %v382 = vadd.f32 %v298, %v381
        %383 = vmatmul.f32.gmra.mxu0 %v332
        %v384 = vpop.f32.mrf.mxu0
        %v385 = vadd.f32 %v300, %v384
        %386 = vmatmul.f32.gmra.mxu0 %v335
        %v387 = vpop.f32.mrf.mxu0
        %v388 = vadd.f32 %v302, %v387
        %389 = vmatmul.f32.gmra.mxu0 %v338
        %v390 = vpop.f32.mrf.mxu0
        %v391 = vadd.f32 %v304, %v390
        %392 = vmatmul.f32.gmra.mxu0 %v341
        %v393 = vpop.f32.mrf.mxu0
        %v394 = vadd.f32 %v306, %v393
        %395 = vmatmul.f32.gmra.mxu0 %v344
        %v396 = vpop.f32.mrf.mxu0
        %v397 = vadd.f32 %v308, %v396
        %398 = vmatmul.f32.gmra.mxu0 %v347
        %v399 = vpop.f32.mrf.mxu0
        %v400 = vadd.f32 %v310, %v399
        %401 = vdwg.mxu0
        %402 = vmatpush.msra.mxu0 0.0
        %403 = vmatpush.msra.mxu0 0.0
        %404 = vmatpush.msra.mxu0 0.0
        %405 = vmatpush.msra.mxu0 0.0
        %406 = vmatpush.msra.mxu0 0.0
        %407 = vmatpush.msra.mxu0 0.0
        %408 = vmatpush.msra.mxu0 0.0
        %409 = vmatpush.msra.mxu0 0.0
        %410 = vmatpush.msra.mxu0 0.0
        %411 = vmatpush.msra.mxu0 0.0
        %412 = vmatpush.msra.mxu0 %v275
        %413 = vmatpush.msra.mxu0 %v273
        %414 = vmatpush.msra.mxu0 %v271
        %415 = vmatpush.msra.mxu0 %v269
        %416 = vmatpush.msra.mxu0 %v267
        %417 = vmatpush.msra.mxu0 %v265
        %418 = vmatmul.f32.gmra.mxu0 %v314
        %v419 = vpop.f32.mrf.mxu0
        %v420 = vadd.f32 %v289, %v419
        %421 = vmatmul.f32.gmra.mxu0 %v317
        %v422 = vpop.f32.mrf.mxu0
        %v423 = vadd.f32 %v291, %v422
        %424 = vmatmul.f32.gmra.mxu0 %v320
        %v425 = vpop.f32.mrf.mxu0
        %v426 = vadd.f32 %v293, %v425
        %427 = vmatmul.f32.gmra.mxu0 %v323
        %v428 = vpop.f32.mrf.mxu0
        %v429 = vadd.f32 %v295, %v428
        %430 = vmatmul.f32.gmra.mxu0 %v326
        %v431 = vpop.f32.mrf.mxu0
        %v432 = vadd.f32 %v297, %v431
        %433 = vmatmul.f32.gmra.mxu0 %v329
        %v434 = vpop.f32.mrf.mxu0
        %v435 = vadd.f32 %v299, %v434
        %436 = vmatmul.f32.gmra.mxu0 %v332
        %v437 = vpop.f32.mrf.mxu0
        %v438 = vadd.f32 %v301, %v437
        %439 = vmatmul.f32.gmra.mxu0 %v335
        %v440 = vpop.f32.mrf.mxu0
        %v441 = vadd.f32 %v303, %v440
        %442 = vmatmul.f32.gmra.mxu0 %v338
        %v443 = vpop.f32.mrf.mxu0
        %v444 = vadd.f32 %v305, %v443
        %445 = vmatmul.f32.gmra.mxu0 %v341
        %v446 = vpop.f32.mrf.mxu0
        %v447 = vadd.f32 %v307, %v446
        %448 = vmatmul.f32.gmra.mxu0 %v344
        %v449 = vpop.f32.mrf.mxu0
        %v450 = vadd.f32 %v309, %v449
        %451 = vmatmul.f32.gmra.mxu0 %v347
        %v452 = vpop.f32.mrf.mxu0
        %v453 = vadd.f32 %v311, %v452
        %454 = vdwg.mxu0
        %v455 = vmax.f32 %v367, 0.0
        %v456 = vmax.f32 %v420, 0.0
        %v457 = vmax.f32 %v370, 0.0
        %v458 = vmax.f32 %v423, 0.0
        %v459 = vmax.f32 %v373, 0.0
        %v460 = vmax.f32 %v426, 0.0
        %v461 = vmax.f32 %v376, 0.0
        %v462 = vmax.f32 %v429, 0.0
        %v463 = vmax.f32 %v379, 0.0
        %v464 = vmax.f32 %v432, 0.0
        %v465 = vmax.f32 %v382, 0.0
        %v466 = vmax.f32 %v435, 0.0
        %v467 = vmax.f32 %v385, 0.0
        %v468 = vmax.f32 %v438, 0.0
        %v469 = vmax.f32 %v388, 0.0
        %v470 = vmax.f32 %v441, 0.0
        %v471 = vmax.f32 %v391, 0.0
        %v472 = vmax.f32 %v444, 0.0
        %v473 = vmax.f32 %v394, 0.0
        %v474 = vmax.f32 %v447, 0.0
        %v475 = vmax.f32 %v397, 0.0
        %v476 = vmax.f32 %v450, 0.0
        %v477 = vmax.f32 %v400, 0.0
        %v478 = vmax.f32 %v453, 0.0
        %v479 = vld [vmem:[%s2] sm:$0xff]
        %v480 = vld [vmem:[%s2 + $0x8] sm:$0xff]
        %v481 = vld [vmem:[%s2 + $0x10] sm:$0xff]
        %v482 = vld [vmem:[%s2 + $0x18] sm:$0xff]
        %v483 = vld [vmem:[%s2 + $0x20] sm:$0xff]
        %v484 = vld [vmem:[%s2 + $0x28] sm:$0xff]
        %vm485 = vcmask 785408
        %v487 = vsel %vm485, %v479, 0
        %v490 = vsel %vm485, %v480, 0
        %v493 = vsel %vm485, %v481, 0
        %v496 = vsel %vm485, %v482, 0
        %v499 = vsel %vm485, %v483, 0
        %v502 = vsel %vm485, %v484, 0
        %504 = vmatpush.msra.mxu0 0.0
        %505 = vmatpush.msra.mxu0 0.0
        %506 = vmatpush.msra.mxu0 0.0
        %507 = vmatpush.msra.mxu0 0.0
        %508 = vmatpush.msra.mxu0 %v477
        %509 = vmatpush.msra.mxu0 %v475
        %510 = vmatpush.msra.mxu0 %v473
        %511 = vmatpush.msra.mxu0 %v471
        %512 = vmatpush.msra.mxu0 %v469
        %513 = vmatpush.msra.mxu0 %v467
        %514 = vmatpush.msra.mxu0 %v465
        %515 = vmatpush.msra.mxu0 %v463
        %516 = vmatpush.msra.mxu0 %v461
        %517 = vmatpush.msra.mxu0 %v459
        %518 = vmatpush.msra.mxu0 %v457
        %519 = vmatpush.msra.mxu0 %v455
        %520 = vmatmul.f32.gmra.mxu0 %v487
        %v521 = vpop.f32.mrf.mxu0
        %v522 = vadd.f32 0.0, %v521
        %523 = vmatmul.f32.gmra.mxu0 %v490
        %v524 = vpop.f32.mrf.mxu0
        %v525 = vadd.f32 0.0, %v524
        %526 = vmatmul.f32.gmra.mxu0 %v493
        %v527 = vpop.f32.mrf.mxu0
        %v528 = vadd.f32 0.0, %v527
        %529 = vmatmul.f32.gmra.mxu0 %v496
        %v530 = vpop.f32.mrf.mxu0
        %v531 = vadd.f32 0.0, %v530
        %532 = vmatmul.f32.gmra.mxu0 %v499
        %v533 = vpop.f32.mrf.mxu0
        %v534 = vadd.f32 0.0, %v533
        %535 = vmatmul.f32.gmra.mxu0 %v502
        %v536 = vpop.f32.mrf.mxu0
        %v537 = vadd.f32 0.0, %v536
        %538 = vdwg.mxu0
        %539 = vmatpush.msra.mxu0 0.0
        %540 = vmatpush.msra.mxu0 0.0
        %541 = vmatpush.msra.mxu0 0.0
        %542 = vmatpush.msra.mxu0 0.0
        %543 = vmatpush.msra.mxu0 %v478
        %544 = vmatpush.msra.mxu0 %v476
        %545 = vmatpush.msra.mxu0 %v474
        %546 = vmatpush.msra.mxu0 %v472
        %547 = vmatpush.msra.mxu0 %v470
        %548 = vmatpush.msra.mxu0 %v468
        %549 = vmatpush.msra.mxu0 %v466
        %550 = vmatpush.msra.mxu0 %v464
        %551 = vmatpush.msra.mxu0 %v462
        %552 = vmatpush.msra.mxu0 %v460
        %553 = vmatpush.msra.mxu0 %v458
        %554 = vmatpush.msra.mxu0 %v456
        %555 = vmatmul.f32.gmra.mxu0 %v487
        %v556 = vpop.f32.mrf.mxu0
        %v557 = vadd.f32 0.0, %v556
        %558 = vmatmul.f32.gmra.mxu0 %v490
        %v559 = vpop.f32.mrf.mxu0
        %v560 = vadd.f32 0.0, %v559
        %561 = vmatmul.f32.gmra.mxu0 %v493
        %v562 = vpop.f32.mrf.mxu0
        %v563 = vadd.f32 0.0, %v562
        %564 = vmatmul.f32.gmra.mxu0 %v496
        %v565 = vpop.f32.mrf.mxu0
        %v566 = vadd.f32 0.0, %v565
        %567 = vmatmul.f32.gmra.mxu0 %v499
        %v568 = vpop.f32.mrf.mxu0
        %v569 = vadd.f32 0.0, %v568
        %570 = vmatmul.f32.gmra.mxu0 %v502
        %v571 = vpop.f32.mrf.mxu0
        %v572 = vadd.f32 0.0, %v571
        %573 = vdwg.mxu0
        %v574 = vadd.f32 %v264, %v522
        %v575 = vadd.f32 %v265, %v557
        %v576 = vadd.f32 %v266, %v525
        %v577 = vadd.f32 %v267, %v560
        %v578 = vadd.f32 %v268, %v528
        %v579 = vadd.f32 %v269, %v563
        %v580 = vadd.f32 %v270, %v531
        %v581 = vadd.f32 %v271, %v566
        %v582 = vadd.f32 %v272, %v534
        %v583 = vadd.f32 %v273, %v569
        %v584 = vadd.f32 %v274, %v537
        %v585 = vadd.f32 %v275, %v572
        %v586 = vld [vmem:[%s3] sm:$0xff]
        %v587 = vld [vmem:[%s3 + $0x8] sm:$0xff]
        %v588 = vld [vmem:[%s3 + $0x10] sm:$0xff]
        %v589 = vld [vmem:[%s3 + $0x18] sm:$0xff]
        %v590 = vld [vmem:[%s3 + $0x20] sm:$0xff]
        %v591 = vld [vmem:[%s3 + $0x28] sm:$0xff]
        %v592 = vld [vmem:[%s3 + $0x30] sm:$0xff]
        %v593 = vld [vmem:[%s3 + $0x38] sm:$0xff]
        %v594 = vld [vmem:[%s3 + $0x40] sm:$0xff]
        %v595 = vld [vmem:[%s3 + $0x48] sm:$0xff]
        %v596 = vld [vmem:[%s3 + $0x50] sm:$0xff]
        %v597 = vld [vmem:[%s3 + $0x58] sm:$0xff]
        %v598 = vadd.f32 %v574, %v586
        %v599 = vadd.f32 %v575, %v587
        %v600 = vadd.f32 %v576, %v588
        %v601 = vadd.f32 %v577, %v589
        %v602 = vadd.f32 %v578, %v590
        %v603 = vadd.f32 %v579, %v591
        %v604 = vadd.f32 %v580, %v592
        %v605 = vadd.f32 %v581, %v593
        %v606 = vadd.f32 %v582, %v594
        %v607 = vadd.f32 %v583, %v595
        %v608 = vadd.f32 %v584, %v596
        %v609 = vadd.f32 %v585, %v597
        %s610 = scalar_lea.vmem %s0, 96
        %v611 = vld [vmem:[%s610] sm:$0xff]
        %v612 = vld [vmem:[%s610 + $0x8] sm:$0xff]
        %v613 = vld [vmem:[%s610 + $0x10] sm:$0xff]
        %v614 = vld [vmem:[%s610 + $0x18] sm:$0xff]
        %v615 = vld [vmem:[%s610 + $0x20] sm:$0xff]
        %v616 = vld [vmem:[%s610 + $0x28] sm:$0xff]
        %v617 = vld [vmem:[%s610 + $0x30] sm:$0xff]
        %v618 = vld [vmem:[%s610 + $0x38] sm:$0xff]
        %v619 = vld [vmem:[%s610 + $0x40] sm:$0xff]
        %v620 = vld [vmem:[%s610 + $0x48] sm:$0xff]
        %v621 = vld [vmem:[%s610 + $0x50] sm:$0xff]
        %v622 = vld [vmem:[%s610 + $0x58] sm:$0xff]
        %s623 = scalar_lea.vmem [#allocation2], 192
        %v624 = vld [vmem:[%s623] sm:$0xff]
        %v625 = vld [vmem:[%s623 + $0x8] sm:$0xff]
        %v626 = vld [vmem:[%s623 + $0x10] sm:$0xff]
        %v627 = vld [vmem:[%s623 + $0x18] sm:$0xff]
        %v628 = vld [vmem:[%s623 + $0x20] sm:$0xff]
        %v629 = vld [vmem:[%s623 + $0x28] sm:$0xff]
        %v630 = vld [vmem:[%s623 + $0x30] sm:$0xff]
        %v631 = vld [vmem:[%s623 + $0x38] sm:$0xff]
        %v632 = vld [vmem:[%s623 + $0x40] sm:$0xff]
        %v633 = vld [vmem:[%s623 + $0x48] sm:$0xff]
        %v634 = vld [vmem:[%s623 + $0x50] sm:$0xff]
        %v635 = vld [vmem:[%s623 + $0x58] sm:$0xff]
        %v636 = vld [vmem:[%s623 + $0x60] sm:$0xff]
        %v637 = vld [vmem:[%s623 + $0x68] sm:$0xff]
        %v638 = vld [vmem:[%s623 + $0x70] sm:$0xff]
        %v639 = vld [vmem:[%s623 + $0x78] sm:$0xff]
        %v640 = vld [vmem:[%s623 + $0x80] sm:$0xff]
        %v641 = vld [vmem:[%s623 + $0x88] sm:$0xff]
        %v642 = vld [vmem:[%s623 + $0x90] sm:$0xff]
        %v643 = vld [vmem:[%s623 + $0x98] sm:$0xff]
        %v644 = vld [vmem:[%s623 + $0xa0] sm:$0xff]
        %v645 = vld [vmem:[%s623 + $0xa8] sm:$0xff]
        %v646 = vld [vmem:[%s623 + $0xb0] sm:$0xff]
        %v647 = vld [vmem:[%s623 + $0xb8] sm:$0xff]
        %v649 = vsel %vm312, %v611, 0
        %v652 = vsel %vm312, %v612, 0
        %v655 = vsel %vm312, %v613, 0
        %v658 = vsel %vm312, %v614, 0
        %v661 = vsel %vm312, %v615, 0
        %v664 = vsel %vm312, %v616, 0
        %v667 = vsel %vm312, %v617, 0
        %v670 = vsel %vm312, %v618, 0
        %v673 = vsel %vm312, %v619, 0
        %v676 = vsel %vm312, %v620, 0
        %v679 = vsel %vm312, %v621, 0
        %v682 = vsel %vm312, %v622, 0
        %684 = vmatpush.msra.mxu0 0.0
        %685 = vmatpush.msra.mxu0 0.0
        %686 = vmatpush.msra.mxu0 0.0
        %687 = vmatpush.msra.mxu0 0.0
        %688 = vmatpush.msra.mxu0 0.0
        %689 = vmatpush.msra.mxu0 0.0
        %690 = vmatpush.msra.mxu0 0.0
        %691 = vmatpush.msra.mxu0 0.0
        %692 = vmatpush.msra.mxu0 0.0
        %693 = vmatpush.msra.mxu0 0.0
        %694 = vmatpush.msra.mxu0 %v608
        %695 = vmatpush.msra.mxu0 %v606
        %696 = vmatpush.msra.mxu0 %v604
        %697 = vmatpush.msra.mxu0 %v602
        %698 = vmatpush.msra.mxu0 %v600
        %699 = vmatpush.msra.mxu0 %v598
        %700 = vmatmul.f32.gmra.mxu0 %v649
        %v701 = vpop.f32.mrf.mxu0
        %v702 = vadd.f32 %v624, %v701
        %703 = vmatmul.f32.gmra.mxu0 %v652
        %v704 = vpop.f32.mrf.mxu0
        %v705 = vadd.f32 %v626, %v704
        %706 = vmatmul.f32.gmra.mxu0 %v655
        %v707 = vpop.f32.mrf.mxu0
        %v708 = vadd.f32 %v628, %v707
        %709 = vmatmul.f32.gmra.mxu0 %v658
        %v710 = vpop.f32.mrf.mxu0
        %v711 = vadd.f32 %v630, %v710
        %712 = vmatmul.f32.gmra.mxu0 %v661
        %v713 = vpop.f32.mrf.mxu0
        %v714 = vadd.f32 %v632, %v713
        %715 = vmatmul.f32.gmra.mxu0 %v664
        %v716 = vpop.f32.mrf.mxu0
        %v717 = vadd.f32 %v634, %v716
        %718 = vmatmul.f32.gmra.mxu0 %v667
        %v719 = vpop.f32.mrf.mxu0
        %v720 = vadd.f32 %v636, %v719
        %721 = vmatmul.f32.gmra.mxu0 %v670
        %v722 = vpop.f32.mrf.mxu0
        %v723 = vadd.f32 %v638, %v722
        %724 = vmatmul.f32.gmra.mxu0 %v673
        %v725 = vpop.f32.mrf.mxu0
        %v726 = vadd.f32 %v640, %v725
        %727 = vmatmul.f32.gmra.mxu0 %v676
        %v728 = vpop.f32.mrf.mxu0
        %v729 = vadd.f32 %v642, %v728
        %730 = vmatmul.f32.gmra.mxu0 %v679
        %v731 = vpop.f32.mrf.mxu0
        %v732 = vadd.f32 %v644, %v731
        %733 = vmatmul.f32.gmra.mxu0 %v682
        %v734 = vpop.f32.mrf.mxu0
        %v735 = vadd.f32 %v646, %v734
        %736 = vdwg.mxu0
        %737 = vmatpush.msra.mxu0 0.0
        %738 = vmatpush.msra.mxu0 0.0
        %739 = vmatpush.msra.mxu0 0.0
        %740 = vmatpush.msra.mxu0 0.0
        %741 = vmatpush.msra.mxu0 0.0
        %742 = vmatpush.msra.mxu0 0.0
        %743 = vmatpush.msra.mxu0 0.0
        %744 = vmatpush.msra.mxu0 0.0
        %745 = vmatpush.msra.mxu0 0.0
        %746 = vmatpush.msra.mxu0 0.0
        %747 = vmatpush.msra.mxu0 %v609
        %748 = vmatpush.msra.mxu0 %v607
        %749 = vmatpush.msra.mxu0 %v605
        %750 = vmatpush.msra.mxu0 %v603
        %751 = vmatpush.msra.mxu0 %v601
        %752 = vmatpush.msra.mxu0 %v599
        %753 = vmatmul.f32.gmra.mxu0 %v649
        %v754 = vpop.f32.mrf.mxu0
        %v755 = vadd.f32 %v625, %v754
        %756 = vmatmul.f32.gmra.mxu0 %v652
        %v757 = vpop.f32.mrf.mxu0
        %v758 = vadd.f32 %v627, %v757
        %759 = vmatmul.f32.gmra.mxu0 %v655
        %v760 = vpop.f32.mrf.mxu0
        %v761 = vadd.f32 %v629, %v760
        %762 = vmatmul.f32.gmra.mxu0 %v658
        %v763 = vpop.f32.mrf.mxu0
        %v764 = vadd.f32 %v631, %v763
        %765 = vmatmul.f32.gmra.mxu0 %v661
        %v766 = vpop.f32.mrf.mxu0
        %v767 = vadd.f32 %v633, %v766
        %768 = vmatmul.f32.gmra.mxu0 %v664
        %v769 = vpop.f32.mrf.mxu0
        %v770 = vadd.f32 %v635, %v769
        %771 = vmatmul.f32.gmra.mxu0 %v667
        %v772 = vpop.f32.mrf.mxu0
        %v773 = vadd.f32 %v637, %v772
        %774 = vmatmul.f32.gmra.mxu0 %v670
        %v775 = vpop.f32.mrf.mxu0
        %v776 = vadd.f32 %v639, %v775
        %777 = vmatmul.f32.gmra.mxu0 %v673
        %v778 = vpop.f32.mrf.mxu0
        %v779 = vadd.f32 %v641, %v778
        %780 = vmatmul.f32.gmra.mxu0 %v676
        %v781 = vpop.f32.mrf.mxu0
        %v782 = vadd.f32 %v643, %v781
        %783 = vmatmul.f32.gmra.mxu0 %v679
        %v784 = vpop.f32.mrf.mxu0
        %v785 = vadd.f32 %v645, %v784
        %786 = vmatmul.f32.gmra.mxu0 %v682
        %v787 = vpop.f32.mrf.mxu0
        %v788 = vadd.f32 %v647, %v787
        %789 = vdwg.mxu0
        %v790 = vmax.f32 %v702, 0.0
        %v791 = vmax.f32 %v755, 0.0
        %v792 = vmax.f32 %v705, 0.0
        %v793 = vmax.f32 %v758, 0.0
        %v794 = vmax.f32 %v708, 0.0
        %v795 = vmax.f32 %v761, 0.0
        %v796 = vmax.f32 %v711, 0.0
        %v797 = vmax.f32 %v764, 0.0
        %v798 = vmax.f32 %v714, 0.0
        %v799 = vmax.f32 %v767, 0.0
        %v800 = vmax.f32 %v717, 0.0
        %v801 = vmax.f32 %v770, 0.0
        %v802 = vmax.f32 %v720, 0.0
        %v803 = vmax.f32 %v773, 0.0
        %v804 = vmax.f32 %v723, 0.0
        %v805 = vmax.f32 %v776, 0.0
        %v806 = vmax.f32 %v726, 0.0
        %v807 = vmax.f32 %v779, 0.0
        %v808 = vmax.f32 %v729, 0.0
        %v809 = vmax.f32 %v782, 0.0
        %v810 = vmax.f32 %v732, 0.0
        %v811 = vmax.f32 %v785, 0.0
        %v812 = vmax.f32 %v735, 0.0
        %v813 = vmax.f32 %v788, 0.0
        %s814 = scalar_lea.vmem %s2, 48
        %v815 = vld [vmem:[%s814] sm:$0xff]
        %v816 = vld [vmem:[%s814 + $0x8] sm:$0xff]
        %v817 = vld [vmem:[%s814 + $0x10] sm:$0xff]
        %v818 = vld [vmem:[%s814 + $0x18] sm:$0xff]
        %v819 = vld [vmem:[%s814 + $0x20] sm:$0xff]
        %v820 = vld [vmem:[%s814 + $0x28] sm:$0xff]
        %v822 = vsel %vm485, %v815, 0
        %v825 = vsel %vm485, %v816, 0
        %v828 = vsel %vm485, %v817, 0
        %v831 = vsel %vm485, %v818, 0
        %v834 = vsel %vm485, %v819, 0
        %v837 = vsel %vm485, %v820, 0
        %839 = vmatpush.msra.mxu0 0.0
        %840 = vmatpush.msra.mxu0 0.0
        %841 = vmatpush.msra.mxu0 0.0
        %842 = vmatpush.msra.mxu0 0.0
        %843 = vmatpush.msra.mxu0 %v812
        %844 = vmatpush.msra.mxu0 %v810
        %845 = vmatpush.msra.mxu0 %v808
        %846 = vmatpush.msra.mxu0 %v806
        %847 = vmatpush.msra.mxu0 %v804
        %848 = vmatpush.msra.mxu0 %v802
        %849 = vmatpush.msra.mxu0 %v800
        %850 = vmatpush.msra.mxu0 %v798
        %851 = vmatpush.msra.mxu0 %v796
        %852 = vmatpush.msra.mxu0 %v794
        %853 = vmatpush.msra.mxu0 %v792
        %854 = vmatpush.msra.mxu0 %v790
        %855 = vmatmul.f32.gmra.mxu0 %v822
        %v856 = vpop.f32.mrf.mxu0
        %v857 = vadd.f32 0.0, %v856
        %858 = vmatmul.f32.gmra.mxu0 %v825
        %v859 = vpop.f32.mrf.mxu0
        %v860 = vadd.f32 0.0, %v859
        %861 = vmatmul.f32.gmra.mxu0 %v828
        %v862 = vpop.f32.mrf.mxu0
        %v863 = vadd.f32 0.0, %v862
        %864 = vmatmul.f32.gmra.mxu0 %v831
        %v865 = vpop.f32.mrf.mxu0
        %v866 = vadd.f32 0.0, %v865
        %867 = vmatmul.f32.gmra.mxu0 %v834
        %v868 = vpop.f32.mrf.mxu0
        %v869 = vadd.f32 0.0, %v868
        %870 = vmatmul.f32.gmra.mxu0 %v837
        %v871 = vpop.f32.mrf.mxu0
        %v872 = vadd.f32 0.0, %v871
        %873 = vdwg.mxu0
        %874 = vmatpush.msra.mxu0 0.0
        %875 = vmatpush.msra.mxu0 0.0
        %876 = vmatpush.msra.mxu0 0.0
        %877 = vmatpush.msra.mxu0 0.0
        %878 = vmatpush.msra.mxu0 %v813
        %879 = vmatpush.msra.mxu0 %v811
        %880 = vmatpush.msra.mxu0 %v809
        %881 = vmatpush.msra.mxu0 %v807
        %882 = vmatpush.msra.mxu0 %v805
        %883 = vmatpush.msra.mxu0 %v803
        %884 = vmatpush.msra.mxu0 %v801
        %885 = vmatpush.msra.mxu0 %v799
        %886 = vmatpush.msra.mxu0 %v797
        %887 = vmatpush.msra.mxu0 %v795
        %888 = vmatpush.msra.mxu0 %v793
        %889 = vmatpush.msra.mxu0 %v791
        %890 = vmatmul.f32.gmra.mxu0 %v822
        %v891 = vpop.f32.mrf.mxu0
        %v892 = vadd.f32 0.0, %v891
        %893 = vmatmul.f32.gmra.mxu0 %v825
        %v894 = vpop.f32.mrf.mxu0
        %v895 = vadd.f32 0.0, %v894
        %896 = vmatmul.f32.gmra.mxu0 %v828
        %v897 = vpop.f32.mrf.mxu0
        %v898 = vadd.f32 0.0, %v897
        %899 = vmatmul.f32.gmra.mxu0 %v831
        %v900 = vpop.f32.mrf.mxu0
        %v901 = vadd.f32 0.0, %v900
        %902 = vmatmul.f32.gmra.mxu0 %v834
        %v903 = vpop.f32.mrf.mxu0
        %v904 = vadd.f32 0.0, %v903
        %905 = vmatmul.f32.gmra.mxu0 %v837
        %v906 = vpop.f32.mrf.mxu0
        %v907 = vadd.f32 0.0, %v906
        %908 = vdwg.mxu0
        %v909 = vadd.f32 %v598, %v857
        %v910 = vadd.f32 %v599, %v892
        %v911 = vadd.f32 %v600, %v860
        %v912 = vadd.f32 %v601, %v895
        %v913 = vadd.f32 %v602, %v863
        %v914 = vadd.f32 %v603, %v898
        %v915 = vadd.f32 %v604, %v866
        %v916 = vadd.f32 %v605, %v901
        %v917 = vadd.f32 %v606, %v869
        %v918 = vadd.f32 %v607, %v904
        %v919 = vadd.f32 %v608, %v872
        %v920 = vadd.f32 %v609, %v907
        %s921 = scalar_lea.vmem %s3, 96
        %v922 = vld [vmem:[%s921] sm:$0xff]
        %v923 = vld [vmem:[%s921 + $0x8] sm:$0xff]
        %v924 = vld [vmem:[%s921 + $0x10] sm:$0xff]
        %v925 = vld [vmem:[%s921 + $0x18] sm:$0xff]
        %v926 = vld [vmem:[%s921 + $0x20] sm:$0xff]
        %v927 = vld [vmem:[%s921 + $0x28] sm:$0xff]
        %v928 = vld [vmem:[%s921 + $0x30] sm:$0xff]
        %v929 = vld [vmem:[%s921 + $0x38] sm:$0xff]
        %v930 = vld [vmem:[%s921 + $0x40] sm:$0xff]
        %v931 = vld [vmem:[%s921 + $0x48] sm:$0xff]
        %v932 = vld [vmem:[%s921 + $0x50] sm:$0xff]
        %v933 = vld [vmem:[%s921 + $0x58] sm:$0xff]
        %v934 = vadd.f32 %v909, %v922
        %v935 = vadd.f32 %v910, %v923
        %v936 = vadd.f32 %v911, %v924
        %v937 = vadd.f32 %v912, %v925
        %v938 = vadd.f32 %v913, %v926
        %v939 = vadd.f32 %v914, %v927
        %v940 = vadd.f32 %v915, %v928
        %v941 = vadd.f32 %v916, %v929
        %v942 = vadd.f32 %v917, %v930
        %v943 = vadd.f32 %v918, %v931
        %v944 = vadd.f32 %v919, %v932
        %v945 = vadd.f32 %v920, %v933
        %946 = vst [vmem:[%s261] sm:$0xff] %v934
        %947 = vst [vmem:[%s261 + $0x8] sm:$0xff] %v935
        %948 = vst [vmem:[%s261 + $0x20] sm:$0xff] %v936
        %949 = vst [vmem:[%s261 + $0x28] sm:$0xff] %v937
        %950 = vst [vmem:[%s261 + $0x40] sm:$0xff] %v938
        %951 = vst [vmem:[%s261 + $0x48] sm:$0xff] %v939
        %952 = vst [vmem:[%s261 + $0x60] sm:$0xff] %v940
        %953 = vst [vmem:[%s261 + $0x68] sm:$0xff] %v941
        %954 = vst [vmem:[%s261 + $0x80] sm:$0xff] %v942
        %955 = vst [vmem:[%s261 + $0x88] sm:$0xff] %v943
        %956 = vst [vmem:[%s261 + $0xa0] sm:$0xff] %v944
        %957 = vst [vmem:[%s261 + $0xa8] sm:$0xff] %v945
        %v958 = vld [vmem:[%s234 + $0x10] sm:$0xff]
        %v959 = vld [vmem:[%s234 + $0x18] sm:$0xff]
        %v960 = vld [vmem:[%s234 + $0x30] sm:$0xff]
        %v961 = vld [vmem:[%s234 + $0x38] sm:$0xff]
        %v962 = vld [vmem:[%s234 + $0x50] sm:$0xff]
        %v963 = vld [vmem:[%s234 + $0x58] sm:$0xff]
        %v964 = vld [vmem:[%s234 + $0x70] sm:$0xff]
        %v965 = vld [vmem:[%s234 + $0x78] sm:$0xff]
        %v966 = vld [vmem:[%s234 + $0x90] sm:$0xff]
        %v967 = vld [vmem:[%s234 + $0x98] sm:$0xff]
        %v968 = vld [vmem:[%s234 + $0xb0] sm:$0xff]
        %v969 = vld [vmem:[%s234 + $0xb8] sm:$0xff]
        %v970 = vld [vmem:[%s0] sm:$0xff]
        %v971 = vld [vmem:[%s0 + $0x8] sm:$0xff]
        %v972 = vld [vmem:[%s0 + $0x10] sm:$0xff]
        %v973 = vld [vmem:[%s0 + $0x18] sm:$0xff]
        %v974 = vld [vmem:[%s0 + $0x20] sm:$0xff]
        %v975 = vld [vmem:[%s0 + $0x28] sm:$0xff]
        %v976 = vld [vmem:[%s0 + $0x30] sm:$0xff]
        %v977 = vld [vmem:[%s0 + $0x38] sm:$0xff]
        %v978 = vld [vmem:[%s0 + $0x40] sm:$0xff]
        %v979 = vld [vmem:[%s0 + $0x48] sm:$0xff]
        %v980 = vld [vmem:[%s0 + $0x50] sm:$0xff]
        %v981 = vld [vmem:[%s0 + $0x58] sm:$0xff]
        %v982 = vld [vmem:[#allocation2] sm:$0xff]
        %v983 = vld [vmem:[#allocation2 + $0x8] sm:$0xff]
        %v984 = vld [vmem:[#allocation2 + $0x10] sm:$0xff]
        %v985 = vld [vmem:[#allocation2 + $0x18] sm:$0xff]
        %v986 = vld [vmem:[#allocation2 + $0x20] sm:$0xff]
        %v987 = vld [vmem:[#allocation2 + $0x28] sm:$0xff]
        %v988 = vld [vmem:[#allocation2 + $0x30] sm:$0xff]
        %v989 = vld [vmem:[#allocation2 + $0x38] sm:$0xff]
        %v990 = vld [vmem:[#allocation2 + $0x40] sm:$0xff]
        %v991 = vld [vmem:[#allocation2 + $0x48] sm:$0xff]
        %v992 = vld [vmem:[#allocation2 + $0x50] sm:$0xff]
        %v993 = vld [vmem:[#allocation2 + $0x58] sm:$0xff]
        %v994 = vld [vmem:[#allocation2 + $0x60] sm:$0xff]
        %v995 = vld [vmem:[#allocation2 + $0x68] sm:$0xff]
        %v996 = vld [vmem:[#allocation2 + $0x70] sm:$0xff]
        %v997 = vld [vmem:[#allocation2 + $0x78] sm:$0xff]
        %v998 = vld [vmem:[#allocation2 + $0x80] sm:$0xff]
        %v999 = vld [vmem:[#allocation2 + $0x88] sm:$0xff]
        %v1000 = vld [vmem:[#allocation2 + $0x90] sm:$0xff]
        %v1001 = vld [vmem:[#allocation2 + $0x98] sm:$0xff]
        %v1002 = vld [vmem:[#allocation2 + $0xa0] sm:$0xff]
        %v1003 = vld [vmem:[#allocation2 + $0xa8] sm:$0xff]
        %v1004 = vld [vmem:[#allocation2 + $0xb0] sm:$0xff]
        %v1005 = vld [vmem:[#allocation2 + $0xb8] sm:$0xff]
        %v1007 = vsel %vm312, %v970, 0
        %v1010 = vsel %vm312, %v971, 0
        %v1013 = vsel %vm312, %v972, 0
        %v1016 = vsel %vm312, %v973, 0
        %v1019 = vsel %vm312, %v974, 0
        %v1022 = vsel %vm312, %v975, 0
        %v1025 = vsel %vm312, %v976, 0
        %v1028 = vsel %vm312, %v977, 0
        %v1031 = vsel %vm312, %v978, 0
        %v1034 = vsel %vm312, %v979, 0
        %v1037 = vsel %vm312, %v980, 0
        %v1040 = vsel %vm312, %v981, 0
        %1042 = vmatpush.msra.mxu0 0.0
        %1043 = vmatpush.msra.mxu0 0.0
        %1044 = vmatpush.msra.mxu0 0.0
        %1045 = vmatpush.msra.mxu0 0.0
        %1046 = vmatpush.msra.mxu0 0.0
        %1047 = vmatpush.msra.mxu0 0.0
        %1048 = vmatpush.msra.mxu0 0.0
        %1049 = vmatpush.msra.mxu0 0.0
        %1050 = vmatpush.msra.mxu0 0.0
        %1051 = vmatpush.msra.mxu0 0.0
        %1052 = vmatpush.msra.mxu0 %v968
        %1053 = vmatpush.msra.mxu0 %v966
        %1054 = vmatpush.msra.mxu0 %v964
        %1055 = vmatpush.msra.mxu0 %v962
        %1056 = vmatpush.msra.mxu0 %v960
        %1057 = vmatpush.msra.mxu0 %v958
        %1058 = vmatmul.f32.gmra.mxu0 %v1007
        %v1059 = vpop.f32.mrf.mxu0
        %v1060 = vadd.f32 %v982, %v1059
        %1061 = vmatmul.f32.gmra.mxu0 %v1010
        %v1062 = vpop.f32.mrf.mxu0
        %v1063 = vadd.f32 %v984, %v1062
        %1064 = vmatmul.f32.gmra.mxu0 %v1013
        %v1065 = vpop.f32.mrf.mxu0
        %v1066 = vadd.f32 %v986, %v1065
        %1067 = vmatmul.f32.gmra.mxu0 %v1016
        %v1068 = vpop.f32.mrf.mxu0
        %v1069 = vadd.f32 %v988, %v1068
        %1070 = vmatmul.f32.gmra.mxu0 %v1019
        %v1071 = vpop.f32.mrf.mxu0
        %v1072 = vadd.f32 %v990, %v1071
        %1073 = vmatmul.f32.gmra.mxu0 %v1022
        %v1074 = vpop.f32.mrf.mxu0
        %v1075 = vadd.f32 %v992, %v1074
        %1076 = vmatmul.f32.gmra.mxu0 %v1025
        %v1077 = vpop.f32.mrf.mxu0
        %v1078 = vadd.f32 %v994, %v1077
        %1079 = vmatmul.f32.gmra.mxu0 %v1028
        %v1080 = vpop.f32.mrf.mxu0
        %v1081 = vadd.f32 %v996, %v1080
        %1082 = vmatmul.f32.gmra.mxu0 %v1031
        %v1083 = vpop.f32.mrf.mxu0
        %v1084 = vadd.f32 %v998, %v1083
        %1085 = vmatmul.f32.gmra.mxu0 %v1034
        %v1086 = vpop.f32.mrf.mxu0
        %v1087 = vadd.f32 %v1000, %v1086
        %1088 = vmatmul.f32.gmra.mxu0 %v1037
        %v1089 = vpop.f32.mrf.mxu0
        %v1090 = vadd.f32 %v1002, %v1089
        %1091 = vmatmul.f32.gmra.mxu0 %v1040
        %v1092 = vpop.f32.mrf.mxu0
        %v1093 = vadd.f32 %v1004, %v1092
        %1094 = vdwg.mxu0
        %1095 = vmatpush.msra.mxu0 0.0
        %1096 = vmatpush.msra.mxu0 0.0
        %1097 = vmatpush.msra.mxu0 0.0
        %1098 = vmatpush.msra.mxu0 0.0
        %1099 = vmatpush.msra.mxu0 0.0
        %1100 = vmatpush.msra.mxu0 0.0
        %1101 = vmatpush.msra.mxu0 0.0
        %1102 = vmatpush.msra.mxu0 0.0
        %1103 = vmatpush.msra.mxu0 0.0
        %1104 = vmatpush.msra.mxu0 0.0
        %1105 = vmatpush.msra.mxu0 %v969
        %1106 = vmatpush.msra.mxu0 %v967
        %1107 = vmatpush.msra.mxu0 %v965
        %1108 = vmatpush.msra.mxu0 %v963
        %1109 = vmatpush.msra.mxu0 %v961
        %1110 = vmatpush.msra.mxu0 %v959
        %1111 = vmatmul.f32.gmra.mxu0 %v1007
        %v1112 = vpop.f32.mrf.mxu0
        %v1113 = vadd.f32 %v983, %v1112
        %1114 = vmatmul.f32.gmra.mxu0 %v1010
        %v1115 = vpop.f32.mrf.mxu0
        %v1116 = vadd.f32 %v985, %v1115
        %1117 = vmatmul.f32.gmra.mxu0 %v1013
        %v1118 = vpop.f32.mrf.mxu0
        %v1119 = vadd.f32 %v987, %v1118
        %1120 = vmatmul.f32.gmra.mxu0 %v1016
        %v1121 = vpop.f32.mrf.mxu0
        %v1122 = vadd.f32 %v989, %v1121
        %1123 = vmatmul.f32.gmra.mxu0 %v1019
        %v1124 = vpop.f32.mrf.mxu0
        %v1125 = vadd.f32 %v991, %v1124
        %1126 = vmatmul.f32.gmra.mxu0 %v1022
        %v1127 = vpop.f32.mrf.mxu0
        %v1128 = vadd.f32 %v993, %v1127
        %1129 = vmatmul.f32.gmra.mxu0 %v1025
        %v1130 = vpop.f32.mrf.mxu0
        %v1131 = vadd.f32 %v995, %v1130
        %1132 = vmatmul.f32.gmra.mxu0 %v1028
        %v1133 = vpop.f32.mrf.mxu0
        %v1134 = vadd.f32 %v997, %v1133
        %1135 = vmatmul.f32.gmra.mxu0 %v1031
        %v1136 = vpop.f32.mrf.mxu0
        %v1137 = vadd.f32 %v999, %v1136
        %1138 = vmatmul.f32.gmra.mxu0 %v1034
        %v1139 = vpop.f32.mrf.mxu0
        %v1140 = vadd.f32 %v1001, %v1139
        %1141 = vmatmul.f32.gmra.mxu0 %v1037
        %v1142 = vpop.f32.mrf.mxu0
        %v1143 = vadd.f32 %v1003, %v1142
        %1144 = vmatmul.f32.gmra.mxu0 %v1040
        %v1145 = vpop.f32.mrf.mxu0
        %v1146 = vadd.f32 %v1005, %v1145
        %1147 = vdwg.mxu0
        %v1148 = vmax.f32 %v1060, 0.0
        %v1149 = vmax.f32 %v1113, 0.0
        %v1150 = vmax.f32 %v1063, 0.0
        %v1151 = vmax.f32 %v1116, 0.0
        %v1152 = vmax.f32 %v1066, 0.0
        %v1153 = vmax.f32 %v1119, 0.0
        %v1154 = vmax.f32 %v1069, 0.0
        %v1155 = vmax.f32 %v1122, 0.0
        %v1156 = vmax.f32 %v1072, 0.0
        %v1157 = vmax.f32 %v1125, 0.0
        %v1158 = vmax.f32 %v1075, 0.0
        %v1159 = vmax.f32 %v1128, 0.0
        %v1160 = vmax.f32 %v1078, 0.0
        %v1161 = vmax.f32 %v1131, 0.0
        %v1162 = vmax.f32 %v1081, 0.0
        %v1163 = vmax.f32 %v1134, 0.0
        %v1164 = vmax.f32 %v1084, 0.0
        %v1165 = vmax.f32 %v1137, 0.0
        %v1166 = vmax.f32 %v1087, 0.0
        %v1167 = vmax.f32 %v1140, 0.0
        %v1168 = vmax.f32 %v1090, 0.0
        %v1169 = vmax.f32 %v1143, 0.0
        %v1170 = vmax.f32 %v1093, 0.0
        %v1171 = vmax.f32 %v1146, 0.0
        %v1172 = vld [vmem:[%s2] sm:$0xff]
        %v1173 = vld [vmem:[%s2 + $0x8] sm:$0xff]
        %v1174 = vld [vmem:[%s2 + $0x10] sm:$0xff]
        %v1175 = vld [vmem:[%s2 + $0x18] sm:$0xff]
        %v1176 = vld [vmem:[%s2 + $0x20] sm:$0xff]
        %v1177 = vld [vmem:[%s2 + $0x28] sm:$0xff]
        %v1179 = vsel %vm485, %v1172, 0
        %v1182 = vsel %vm485, %v1173, 0
        %v1185 = vsel %vm485, %v1174, 0
        %v1188 = vsel %vm485, %v1175, 0
        %v1191 = vsel %vm485, %v1176, 0
        %v1194 = vsel %vm485, %v1177, 0
        %1196 = vmatpush.msra.mxu0 0.0
        %1197 = vmatpush.msra.mxu0 0.0
        %1198 = vmatpush.msra.mxu0 0.0
        %1199 = vmatpush.msra.mxu0 0.0
        %1200 = vmatpush.msra.mxu0 %v1170
        %1201 = vmatpush.msra.mxu0 %v1168
        %1202 = vmatpush.msra.mxu0 %v1166
        %1203 = vmatpush.msra.mxu0 %v1164
        %1204 = vmatpush.msra.mxu0 %v1162
        %1205 = vmatpush.msra.mxu0 %v1160
        %1206 = vmatpush.msra.mxu0 %v1158
        %1207 = vmatpush.msra.mxu0 %v1156
        %1208 = vmatpush.msra.mxu0 %v1154
        %1209 = vmatpush.msra.mxu0 %v1152
        %1210 = vmatpush.msra.mxu0 %v1150
        %1211 = vmatpush.msra.mxu0 %v1148
        %1212 = vmatmul.f32.gmra.mxu0 %v1179
        %v1213 = vpop.f32.mrf.mxu0
        %v1214 = vadd.f32 0.0, %v1213
        %1215 = vmatmul.f32.gmra.mxu0 %v1182
        %v1216 = vpop.f32.mrf.mxu0
        %v1217 = vadd.f32 0.0, %v1216
        %1218 = vmatmul.f32.gmra.mxu0 %v1185
        %v1219 = vpop.f32.mrf.mxu0
        %v1220 = vadd.f32 0.0, %v1219
        %1221 = vmatmul.f32.gmra.mxu0 %v1188
        %v1222 = vpop.f32.mrf.mxu0
        %v1223 = vadd.f32 0.0, %v1222
        %1224 = vmatmul.f32.gmra.mxu0 %v1191
        %v1225 = vpop.f32.mrf.mxu0
        %v1226 = vadd.f32 0.0, %v1225
        %1227 = vmatmul.f32.gmra.mxu0 %v1194
        %v1228 = vpop.f32.mrf.mxu0
        %v1229 = vadd.f32 0.0, %v1228
        %1230 = vdwg.mxu0
        %1231 = vmatpush.msra.mxu0 0.0
        %1232 = vmatpush.msra.mxu0 0.0
        %1233 = vmatpush.msra.mxu0 0.0
        %1234 = vmatpush.msra.mxu0 0.0
        %1235 = vmatpush.msra.mxu0 %v1171
        %1236 = vmatpush.msra.mxu0 %v1169
        %1237 = vmatpush.msra.mxu0 %v1167
        %1238 = vmatpush.msra.mxu0 %v1165
        %1239 = vmatpush.msra.mxu0 %v1163
        %1240 = vmatpush.msra.mxu0 %v1161
        %1241 = vmatpush.msra.mxu0 %v1159
        %1242 = vmatpush.msra.mxu0 %v1157
        %1243 = vmatpush.msra.mxu0 %v1155
        %1244 = vmatpush.msra.mxu0 %v1153
        %1245 = vmatpush.msra.mxu0 %v1151
        %1246 = vmatpush.msra.mxu0 %v1149
        %1247 = vmatmul.f32.gmra.mxu0 %v1179
        %v1248 = vpop.f32.mrf.mxu0
        %v1249 = vadd.f32 0.0, %v1248
        %1250 = vmatmul.f32.gmra.mxu0 %v1182
        %v1251 = vpop.f32.mrf.mxu0
        %v1252 = vadd.f32 0.0, %v1251
        %1253 = vmatmul.f32.gmra.mxu0 %v1185
        %v1254 = vpop.f32.mrf.mxu0
        %v1255 = vadd.f32 0.0, %v1254
        %1256 = vmatmul.f32.gmra.mxu0 %v1188
        %v1257 = vpop.f32.mrf.mxu0
        %v1258 = vadd.f32 0.0, %v1257
        %1259 = vmatmul.f32.gmra.mxu0 %v1191
        %v1260 = vpop.f32.mrf.mxu0
        %v1261 = vadd.f32 0.0, %v1260
        %1262 = vmatmul.f32.gmra.mxu0 %v1194
        %v1263 = vpop.f32.mrf.mxu0
        %v1264 = vadd.f32 0.0, %v1263
        %1265 = vdwg.mxu0
        %v1266 = vadd.f32 %v958, %v1214
        %v1267 = vadd.f32 %v959, %v1249
        %v1268 = vadd.f32 %v960, %v1217
        %v1269 = vadd.f32 %v961, %v1252
        %v1270 = vadd.f32 %v962, %v1220
        %v1271 = vadd.f32 %v963, %v1255
        %v1272 = vadd.f32 %v964, %v1223
        %v1273 = vadd.f32 %v965, %v1258
        %v1274 = vadd.f32 %v966, %v1226
        %v1275 = vadd.f32 %v967, %v1261
        %v1276 = vadd.f32 %v968, %v1229
        %v1277 = vadd.f32 %v969, %v1264
        %v1278 = vld [vmem:[%s3] sm:$0xff]
        %v1279 = vld [vmem:[%s3 + $0x8] sm:$0xff]
        %v1280 = vld [vmem:[%s3 + $0x10] sm:$0xff]
        %v1281 = vld [vmem:[%s3 + $0x18] sm:$0xff]
        %v1282 = vld [vmem:[%s3 + $0x20] sm:$0xff]
        %v1283 = vld [vmem:[%s3 + $0x28] sm:$0xff]
        %v1284 = vld [vmem:[%s3 + $0x30] sm:$0xff]
        %v1285 = vld [vmem:[%s3 + $0x38] sm:$0xff]
        %v1286 = vld [vmem:[%s3 + $0x40] sm:$0xff]
        %v1287 = vld [vmem:[%s3 + $0x48] sm:$0xff]
        %v1288 = vld [vmem:[%s3 + $0x50] sm:$0xff]
        %v1289 = vld [vmem:[%s3 + $0x58] sm:$0xff]
        %v1290 = vadd.f32 %v1266, %v1278
        %v1291 = vadd.f32 %v1267, %v1279
        %v1292 = vadd.f32 %v1268, %v1280
        %v1293 = vadd.f32 %v1269, %v1281
        %v1294 = vadd.f32 %v1270, %v1282
        %v1295 = vadd.f32 %v1271, %v1283
        %v1296 = vadd.f32 %v1272, %v1284
        %v1297 = vadd.f32 %v1273, %v1285
        %v1298 = vadd.f32 %v1274, %v1286
        %v1299 = vadd.f32 %v1275, %v1287
        %v1300 = vadd.f32 %v1276, %v1288
        %v1301 = vadd.f32 %v1277, %v1289
        %v1302 = vld [vmem:[%s610] sm:$0xff]
        %v1303 = vld [vmem:[%s610 + $0x8] sm:$0xff]
        %v1304 = vld [vmem:[%s610 + $0x10] sm:$0xff]
        %v1305 = vld [vmem:[%s610 + $0x18] sm:$0xff]
        %v1306 = vld [vmem:[%s610 + $0x20] sm:$0xff]
        %v1307 = vld [vmem:[%s610 + $0x28] sm:$0xff]
        %v1308 = vld [vmem:[%s610 + $0x30] sm:$0xff]
        %v1309 = vld [vmem:[%s610 + $0x38] sm:$0xff]
        %v1310 = vld [vmem:[%s610 + $0x40] sm:$0xff]
        %v1311 = vld [vmem:[%s610 + $0x48] sm:$0xff]
        %v1312 = vld [vmem:[%s610 + $0x50] sm:$0xff]
        %v1313 = vld [vmem:[%s610 + $0x58] sm:$0xff]
        %v1314 = vld [vmem:[%s623] sm:$0xff]
        %v1315 = vld [vmem:[%s623 + $0x8] sm:$0xff]
        %v1316 = vld [vmem:[%s623 + $0x10] sm:$0xff]
        %v1317 = vld [vmem:[%s623 + $0x18] sm:$0xff]
        %v1318 = vld [vmem:[%s623 + $0x20] sm:$0xff]
        %v1319 = vld [vmem:[%s623 + $0x28] sm:$0xff]
        %v1320 = vld [vmem:[%s623 + $0x30] sm:$0xff]
        %v1321 = vld [vmem:[%s623 + $0x38] sm:$0xff]
        %v1322 = vld [vmem:[%s623 + $0x40] sm:$0xff]
        %v1323 = vld [vmem:[%s623 + $0x48] sm:$0xff]
        %v1324 = vld [vmem:[%s623 + $0x50] sm:$0xff]
        %v1325 = vld [vmem:[%s623 + $0x58] sm:$0xff]
        %v1326 = vld [vmem:[%s623 + $0x60] sm:$0xff]
        %v1327 = vld [vmem:[%s623 + $0x68] sm:$0xff]
        %v1328 = vld [vmem:[%s623 + $0x70] sm:$0xff]
        %v1329 = vld [vmem:[%s623 + $0x78] sm:$0xff]
        %v1330 = vld [vmem:[%s623 + $0x80] sm:$0xff]
        %v1331 = vld [vmem:[%s623 + $0x88] sm:$0xff]
        %v1332 = vld [vmem:[%s623 + $0x90] sm:$0xff]
        %v1333 = vld [vmem:[%s623 + $0x98] sm:$0xff]
        %v1334 = vld [vmem:[%s623 + $0xa0] sm:$0xff]
        %v1335 = vld [vmem:[%s623 + $0xa8] sm:$0xff]
        %v1336 = vld [vmem:[%s623 + $0xb0] sm:$0xff]
        %v1337 = vld [vmem:[%s623 + $0xb8] sm:$0xff]
        %v1339 = vsel %vm312, %v1302, 0
        %v1342 = vsel %vm312, %v1303, 0
        %v1345 = vsel %vm312, %v1304, 0
        %v1348 = vsel %vm312, %v1305, 0
        %v1351 = vsel %vm312, %v1306, 0
        %v1354 = vsel %vm312, %v1307, 0
        %v1357 = vsel %vm312, %v1308, 0
        %v1360 = vsel %vm312, %v1309, 0
        %v1363 = vsel %vm312, %v1310, 0
        %v1366 = vsel %vm312, %v1311, 0
        %v1369 = vsel %vm312, %v1312, 0
        %v1372 = vsel %vm312, %v1313, 0
        %1374 = vmatpush.msra.mxu0 0.0
        %1375 = vmatpush.msra.mxu0 0.0
        %1376 = vmatpush.msra.mxu0 0.0
        %1377 = vmatpush.msra.mxu0 0.0
        %1378 = vmatpush.msra.mxu0 0.0
        %1379 = vmatpush.msra.mxu0 0.0
        %1380 = vmatpush.msra.mxu0 0.0
        %1381 = vmatpush.msra.mxu0 0.0
        %1382 = vmatpush.msra.mxu0 0.0
        %1383 = vmatpush.msra.mxu0 0.0
        %1384 = vmatpush.msra.mxu0 %v1300
        %1385 = vmatpush.msra.mxu0 %v1298
        %1386 = vmatpush.msra.mxu0 %v1296
        %1387 = vmatpush.msra.mxu0 %v1294
        %1388 = vmatpush.msra.mxu0 %v1292
        %1389 = vmatpush.msra.mxu0 %v1290
        %1390 = vmatmul.f32.gmra.mxu0 %v1339
        %v1391 = vpop.f32.mrf.mxu0
        %v1392 = vadd.f32 %v1314, %v1391
        %1393 = vmatmul.f32.gmra.mxu0 %v1342
        %v1394 = vpop.f32.mrf.mxu0
        %v1395 = vadd.f32 %v1316, %v1394
        %1396 = vmatmul.f32.gmra.mxu0 %v1345
        %v1397 = vpop.f32.mrf.mxu0
        %v1398 = vadd.f32 %v1318, %v1397
        %1399 = vmatmul.f32.gmra.mxu0 %v1348
        %v1400 = vpop.f32.mrf.mxu0
        %v1401 = vadd.f32 %v1320, %v1400
        %1402 = vmatmul.f32.gmra.mxu0 %v1351
        %v1403 = vpop.f32.mrf.mxu0
        %v1404 = vadd.f32 %v1322, %v1403
        %1405 = vmatmul.f32.gmra.mxu0 %v1354
        %v1406 = vpop.f32.mrf.mxu0
        %v1407 = vadd.f32 %v1324, %v1406
        %1408 = vmatmul.f32.gmra.mxu0 %v1357
        %v1409 = vpop.f32.mrf.mxu0
        %v1410 = vadd.f32 %v1326, %v1409
        %1411 = vmatmul.f32.gmra.mxu0 %v1360
        %v1412 = vpop.f32.mrf.mxu0
        %v1413 = vadd.f32 %v1328, %v1412
        %1414 = vmatmul.f32.gmra.mxu0 %v1363
        %v1415 = vpop.f32.mrf.mxu0
        %v1416 = vadd.f32 %v1330, %v1415
        %1417 = vmatmul.f32.gmra.mxu0 %v1366
        %v1418 = vpop.f32.mrf.mxu0
        %v1419 = vadd.f32 %v1332, %v1418
        %1420 = vmatmul.f32.gmra.mxu0 %v1369
        %v1421 = vpop.f32.mrf.mxu0
        %v1422 = vadd.f32 %v1334, %v1421
        %1423 = vmatmul.f32.gmra.mxu0 %v1372
        %v1424 = vpop.f32.mrf.mxu0
        %v1425 = vadd.f32 %v1336, %v1424
        %1426 = vdwg.mxu0
        %1427 = vmatpush.msra.mxu0 0.0
        %1428 = vmatpush.msra.mxu0 0.0
        %1429 = vmatpush.msra.mxu0 0.0
        %1430 = vmatpush.msra.mxu0 0.0
        %1431 = vmatpush.msra.mxu0 0.0
        %1432 = vmatpush.msra.mxu0 0.0
        %1433 = vmatpush.msra.mxu0 0.0
        %1434 = vmatpush.msra.mxu0 0.0
        %1435 = vmatpush.msra.mxu0 0.0
        %1436 = vmatpush.msra.mxu0 0.0
        %1437 = vmatpush.msra.mxu0 %v1301
        %1438 = vmatpush.msra.mxu0 %v1299
        %1439 = vmatpush.msra.mxu0 %v1297
        %1440 = vmatpush.msra.mxu0 %v1295
        %1441 = vmatpush.msra.mxu0 %v1293
        %1442 = vmatpush.msra.mxu0 %v1291
        %1443 = vmatmul.f32.gmra.mxu0 %v1339
        %v1444 = vpop.f32.mrf.mxu0
        %v1445 = vadd.f32 %v1315, %v1444
        %1446 = vmatmul.f32.gmra.mxu0 %v1342
        %v1447 = vpop.f32.mrf.mxu0
        %v1448 = vadd.f32 %v1317, %v1447
        %1449 = vmatmul.f32.gmra.mxu0 %v1345
        %v1450 = vpop.f32.mrf.mxu0
        %v1451 = vadd.f32 %v1319, %v1450
        %1452 = vmatmul.f32.gmra.mxu0 %v1348
        %v1453 = vpop.f32.mrf.mxu0
        %v1454 = vadd.f32 %v1321, %v1453
        %1455 = vmatmul.f32.gmra.mxu0 %v1351
        %v1456 = vpop.f32.mrf.mxu0
        %v1457 = vadd.f32 %v1323, %v1456
        %1458 = vmatmul.f32.gmra.mxu0 %v1354
        %v1459 = vpop.f32.mrf.mxu0
        %v1460 = vadd.f32 %v1325, %v1459
        %1461 = vmatmul.f32.gmra.mxu0 %v1357
        %v1462 = vpop.f32.mrf.mxu0
        %v1463 = vadd.f32 %v1327, %v1462
        %1464 = vmatmul.f32.gmra.mxu0 %v1360
        %v1465 = vpop.f32.mrf.mxu0
        %v1466 = vadd.f32 %v1329, %v1465
        %1467 = vmatmul.f32.gmra.mxu0 %v1363
        %v1468 = vpop.f32.mrf.mxu0
        %v1469 = vadd.f32 %v1331, %v1468
        %1470 = vmatmul.f32.gmra.mxu0 %v1366
        %v1471 = vpop.f32.mrf.mxu0
        %v1472 = vadd.f32 %v1333, %v1471
        %1473 = vmatmul.f32.gmra.mxu0 %v1369
        %v1474 = vpop.f32.mrf.mxu0
        %v1475 = vadd.f32 %v1335, %v1474
        %1476 = vmatmul.f32.gmra.mxu0 %v1372
        %v1477 = vpop.f32.mrf.mxu0
        %v1478 = vadd.f32 %v1337, %v1477
        %1479 = vdwg.mxu0
        %v1480 = vmax.f32 %v1392, 0.0
        %v1481 = vmax.f32 %v1445, 0.0
        %v1482 = vmax.f32 %v1395, 0.0
        %v1483 = vmax.f32 %v1448, 0.0
        %v1484 = vmax.f32 %v1398, 0.0
        %v1485 = vmax.f32 %v1451, 0.0
        %v1486 = vmax.f32 %v1401, 0.0
        %v1487 = vmax.f32 %v1454, 0.0
        %v1488 = vmax.f32 %v1404, 0.0
        %v1489 = vmax.f32 %v1457, 0.0
        %v1490 = vmax.f32 %v1407, 0.0
        %v1491 = vmax.f32 %v1460, 0.0
        %v1492 = vmax.f32 %v1410, 0.0
        %v1493 = vmax.f32 %v1463, 0.0
        %v1494 = vmax.f32 %v1413, 0.0
        %v1495 = vmax.f32 %v1466, 0.0
        %v1496 = vmax.f32 %v1416, 0.0
        %v1497 = vmax.f32 %v1469, 0.0
        %v1498 = vmax.f32 %v1419, 0.0
        %v1499 = vmax.f32 %v1472, 0.0
        %v1500 = vmax.f32 %v1422, 0.0
        %v1501 = vmax.f32 %v1475, 0.0
        %v1502 = vmax.f32 %v1425, 0.0
        %v1503 = vmax.f32 %v1478, 0.0
        %v1504 = vld [vmem:[%s814] sm:$0xff]
        %v1505 = vld [vmem:[%s814 + $0x8] sm:$0xff]
        %v1506 = vld [vmem:[%s814 + $0x10] sm:$0xff]
        %v1507 = vld [vmem:[%s814 + $0x18] sm:$0xff]
        %v1508 = vld [vmem:[%s814 + $0x20] sm:$0xff]
        %v1509 = vld [vmem:[%s814 + $0x28] sm:$0xff]
        %v1511 = vsel %vm485, %v1504, 0
        %v1514 = vsel %vm485, %v1505, 0
        %v1517 = vsel %vm485, %v1506, 0
        %v1520 = vsel %vm485, %v1507, 0
        %v1523 = vsel %vm485, %v1508, 0
        %v1526 = vsel %vm485, %v1509, 0
        %1528 = vmatpush.msra.mxu0 0.0
        %1529 = vmatpush.msra.mxu0 0.0
        %1530 = vmatpush.msra.mxu0 0.0
        %1531 = vmatpush.msra.mxu0 0.0
        %1532 = vmatpush.msra.mxu0 %v1502
        %1533 = vmatpush.msra.mxu0 %v1500
        %1534 = vmatpush.msra.mxu0 %v1498
        %1535 = vmatpush.msra.mxu0 %v1496
        %1536 = vmatpush.msra.mxu0 %v1494
        %1537 = vmatpush.msra.mxu0 %v1492
        %1538 = vmatpush.msra.mxu0 %v1490
        %1539 = vmatpush.msra.mxu0 %v1488
        %1540 = vmatpush.msra.mxu0 %v1486
        %1541 = vmatpush.msra.mxu0 %v1484
        %1542 = vmatpush.msra.mxu0 %v1482
        %1543 = vmatpush.msra.mxu0 %v1480
        %1544 = vmatmul.f32.gmra.mxu0 %v1511
        %v1545 = vpop.f32.mrf.mxu0
        %v1546 = vadd.f32 0.0, %v1545
        %1547 = vmatmul.f32.gmra.mxu0 %v1514
        %v1548 = vpop.f32.mrf.mxu0
        %v1549 = vadd.f32 0.0, %v1548
        %1550 = vmatmul.f32.gmra.mxu0 %v1517
        %v1551 = vpop.f32.mrf.mxu0
        %v1552 = vadd.f32 0.0, %v1551
        %1553 = vmatmul.f32.gmra.mxu0 %v1520
        %v1554 = vpop.f32.mrf.mxu0
        %v1555 = vadd.f32 0.0, %v1554
        %1556 = vmatmul.f32.gmra.mxu0 %v1523
        %v1557 = vpop.f32.mrf.mxu0
        %v1558 = vadd.f32 0.0, %v1557
        %1559 = vmatmul.f32.gmra.mxu0 %v1526
        %v1560 = vpop.f32.mrf.mxu0
        %v1561 = vadd.f32 0.0, %v1560
        %1562 = vdwg.mxu0
        %1563 = vmatpush.msra.mxu0 0.0
        %1564 = vmatpush.msra.mxu0 0.0
        %1565 = vmatpush.msra.mxu0 0.0
        %1566 = vmatpush.msra.mxu0 0.0
        %1567 = vmatpush.msra.mxu0 %v1503
        %1568 = vmatpush.msra.mxu0 %v1501
        %1569 = vmatpush.msra.mxu0 %v1499
        %1570 = vmatpush.msra.mxu0 %v1497
        %1571 = vmatpush.msra.mxu0 %v1495
        %1572 = vmatpush.msra.mxu0 %v1493
        %1573 = vmatpush.msra.mxu0 %v1491
        %1574 = vmatpush.msra.mxu0 %v1489
        %1575 = vmatpush.msra.mxu0 %v1487
        %1576 = vmatpush.msra.mxu0 %v1485
        %1577 = vmatpush.msra.mxu0 %v1483
        %1578 = vmatpush.msra.mxu0 %v1481
        %1579 = vmatmul.f32.gmra.mxu0 %v1511
        %v1580 = vpop.f32.mrf.mxu0
        %v1581 = vadd.f32 0.0, %v1580
        %1582 = vmatmul.f32.gmra.mxu0 %v1514
        %v1583 = vpop.f32.mrf.mxu0
        %v1584 = vadd.f32 0.0, %v1583
        %1585 = vmatmul.f32.gmra.mxu0 %v1517
        %v1586 = vpop.f32.mrf.mxu0
        %v1587 = vadd.f32 0.0, %v1586
        %1588 = vmatmul.f32.gmra.mxu0 %v1520
        %v1589 = vpop.f32.mrf.mxu0
        %v1590 = vadd.f32 0.0, %v1589
        %1591 = vmatmul.f32.gmra.mxu0 %v1523
        %v1592 = vpop.f32.mrf.mxu0
        %v1593 = vadd.f32 0.0, %v1592
        %1594 = vmatmul.f32.gmra.mxu0 %v1526
        %v1595 = vpop.f32.mrf.mxu0
        %v1596 = vadd.f32 0.0, %v1595
        %1597 = vdwg.mxu0
        %v1598 = vadd.f32 %v1290, %v1546
        %v1599 = vadd.f32 %v1291, %v1581
        %v1600 = vadd.f32 %v1292, %v1549
        %v1601 = vadd.f32 %v1293, %v1584
        %v1602 = vadd.f32 %v1294, %v1552
        %v1603 = vadd.f32 %v1295, %v1587
        %v1604 = vadd.f32 %v1296, %v1555
        %v1605 = vadd.f32 %v1297, %v1590
        %v1606 = vadd.f32 %v1298, %v1558
        %v1607 = vadd.f32 %v1299, %v1593
        %v1608 = vadd.f32 %v1300, %v1561
        %v1609 = vadd.f32 %v1301, %v1596
        %v1610 = vld [vmem:[%s921] sm:$0xff]
        %v1611 = vld [vmem:[%s921 + $0x8] sm:$0xff]
        %v1612 = vld [vmem:[%s921 + $0x10] sm:$0xff]
        %v1613 = vld [vmem:[%s921 + $0x18] sm:$0xff]
        %v1614 = vld [vmem:[%s921 + $0x20] sm:$0xff]
        %v1615 = vld [vmem:[%s921 + $0x28] sm:$0xff]
        %v1616 = vld [vmem:[%s921 + $0x30] sm:$0xff]
        %v1617 = vld [vmem:[%s921 + $0x38] sm:$0xff]
        %v1618 = vld [vmem:[%s921 + $0x40] sm:$0xff]
        %v1619 = vld [vmem:[%s921 + $0x48] sm:$0xff]
        %v1620 = vld [vmem:[%s921 + $0x50] sm:$0xff]
        %v1621 = vld [vmem:[%s921 + $0x58] sm:$0xff]
        %v1622 = vadd.f32 %v1598, %v1610
        %v1623 = vadd.f32 %v1599, %v1611
        %v1624 = vadd.f32 %v1600, %v1612
        %v1625 = vadd.f32 %v1601, %v1613
        %v1626 = vadd.f32 %v1602, %v1614
        %v1627 = vadd.f32 %v1603, %v1615
        %v1628 = vadd.f32 %v1604, %v1616
        %v1629 = vadd.f32 %v1605, %v1617
        %v1630 = vadd.f32 %v1606, %v1618
        %v1631 = vadd.f32 %v1607, %v1619
        %v1632 = vadd.f32 %v1608, %v1620
        %v1633 = vadd.f32 %v1609, %v1621
        %1634 = vst [vmem:[%s261 + $0x10] sm:$0xff] %v1622
        %1635 = vst [vmem:[%s261 + $0x18] sm:$0xff] %v1623
        %1636 = vst [vmem:[%s261 + $0x30] sm:$0xff] %v1624
        %1637 = vst [vmem:[%s261 + $0x38] sm:$0xff] %v1625
        %1638 = vst [vmem:[%s261 + $0x50] sm:$0xff] %v1626
        %1639 = vst [vmem:[%s261 + $0x58] sm:$0xff] %v1627
        %1640 = vst [vmem:[%s261 + $0x70] sm:$0xff] %v1628
        %1641 = vst [vmem:[%s261 + $0x78] sm:$0xff] %v1629
        %1642 = vst [vmem:[%s261 + $0x90] sm:$0xff] %v1630
        %1643 = vst [vmem:[%s261 + $0x98] sm:$0xff] %v1631
        %1644 = vst [vmem:[%s261 + $0xb0] sm:$0xff] %v1632
        %1645 = vst [vmem:[%s261 + $0xb8] sm:$0xff] %v1633
        %s1646 = sand.u32 %s141, 1
        %s1647 = scalar_lea.sflag [#allocation4], %s1646
        %s1648 = sand.u32 %s141, 1
        %s1649 = smul.addr %s1648, 192
        %s1650 = scalar_lea.vmem [#allocation7], %s1649
        // Predicated region
        $region49: #{tpu_custom_call.1} parent=39 // pred_check
          %p1651 = pneg %p151
        $region50: #{tpu_custom_call.1} parent=39 // pred_check_branch
          %1653 = sbr.rel (%p1651) target = $region52
        $region51: #{tpu_custom_call.1} parent=39 // pred_region
          %s1654 = smul.u32 4, %s23
          %1656 = vsyncadd %s1647, 0
          %s1657 = smul.addr %s1654, 8
          %s1658 = scalar_lea.hbm %s5, %s1657
          %s1659 = sshll.u32 %s1650, 4
          %s1660 = int_to_ptr.vmem [resolvable:$true] %s1659
          %s1661 = sshll.u32 %s1658, 4
          %s1662 = int_to_ptr.hbm [resolvable:$true] %s1661
          %1667 = dma.vmem_to_hbm [thread:$0]  %s1660, 3072, %s1662, %s1647, 512, 1024, 32
        $region52: #{tpu_custom_call.1} parent=39 // pred_fallthru
          _
      $region40: #{tpu_custom_call.1} parent=5 // pred_fallthru
        _
      %p1668 = scmp.le.s32.totalorder 2, %s18
      // Predicated region
      $region53: #{tpu_custom_call.1} parent=5 // pred_check
        %p1669 = pneg %p1668
      $region54: #{tpu_custom_call.1} parent=5 // pred_check_branch
        %1671 = sbr.rel (%p1669) target = $region56
      $region55: #{tpu_custom_call.1} parent=5 // pred_region
        %s1672 = ssub.s32 %s18, 2
        // Predicated region
        $region57: #{tpu_custom_call.1} parent=55 // pred_check
          %p1673 = pneg %p157
        $region58: #{tpu_custom_call.1} parent=55 // pred_check_branch
          %1675 = sbr.rel (%p1673) target = $region60
        $region59: #{tpu_custom_call.1} parent=55 // pred_region
          %s1676 = sand.u32 %s142, 1
          %s1677 = scalar_lea.sflag [#allocation4], %s1676
          %s1678 = sand.u32 %s142, 1
          %s1679 = smul.addr %s1678, 192
          %s1680 = scalar_lea.vmem [#allocation7], %s1679
          %1682 = dma.done %s1677, 3072
        $region60: #{tpu_custom_call.1} parent=55 // pred_fallthru
          _
      $region56: #{tpu_custom_call.1} parent=5 // pred_fallthru
        _
    $region6: #{tpu_custom_call.1} parent=1 // loop_footer
      %s22 = sadd.s32 1, %s18
    $region7: #{tpu_custom_call.1} parent=1 // loop_footer_branch
      %17 = sbr.rel target = $region3
    $region8: #{tpu_custom_call.1} parent=1 // loop_exit
      _
    %1683 = vsyncpa [#allocation3], 1
    %s1684 = scalar_lea.sflag [#allocation3], 1
    %1685 = vsyncpa %s1684, 1
    %1686 = vsyncpa [#allocation6], 1
    %s1687 = scalar_lea.sflag [#allocation6], 1
    %1688 = vsyncpa %s1687, 1
    %1689 = vsyncpa [#allocation4], 1
    %s1690 = scalar_lea.sflag [#allocation4], 1
    %1691 = vsyncpa %s1690, 1

</llo_original>
